<compile_context>
chip_gen: v6e
topology: v6e:2x2x1
jax: 0.10.0
libtpu: 0.0.40
codegen_flags: <defaults>
</compile_context>

<pallas_src>
import jax
import jax.numpy as jnp
from jax.experimental import pallas as pl
from jax.experimental.pallas import tpu as pltpu

# ----------------------------- small config -----------------------------
CONFIG = dict(
    res_channels=8,
    skip_channels=8,
    num_wave_layer=3,
    num_stack_wave_layer=2,
)
B, T = 2, 32
SKIP_SIZE = 8
K = 2                                       # ResidualBlock hard-codes kernel_size=2
DILATIONS = tuple(
    2 ** l
    for _ in range(CONFIG["num_stack_wave_layer"])
    for l in range(CONFIG["num_wave_layer"])
)                                           # (1, 2, 4, 1, 2, 4)
NB = len(DILATIONS)

RES = CONFIG["res_channels"]
SKP = CONFIG["skip_channels"]

N = B * T                                   # real flattened (batch, time) lanes
NP = ((N + 127) // 128) * 128               # padded to a full 128-lane tile
WPAD = 16                                   # padded weight-slot rows/cols
CPAD = 16                                   # padded bias rows

# weight-blob slot indices
W_DIL0 = 0                                  # fused (tap0 | tap1) dilated-conv weights
W_RS0 = NB                                  # fused (conv_res | conv_skip) weights
NW = 2 * NB
# bias-blob column indices
B_DIL0 = 0
B_RES0 = NB
B_SKP0 = 2 * NB
NBIAS = 3 * NB


# ----------------------------- pure-JAX reference -----------------------------
def _shift_right(a, s):
    """Causal shift along time axis (axis=1) by s steps with zero fill."""
    if s == 0:
        return a
    b_, t_, c_ = a.shape
    pad = jnp.zeros((b_, s, c_), a.dtype)
    return jnp.concatenate([pad, a[:, : t_ - s, :]], axis=1)


def _mm(a, w):
    """(B, T, Cin) @ (Cin, Cout) -> (B, T, Cout)."""
    b_, t_, c_ = a.shape
    y = jnp.dot(a.reshape(b_ * t_, c_), w, preferred_element_type=jnp.float32)
    return y.reshape(b_, t_, w.shape[-1])


def reference_forward(x_nct, params, skip_size):
    """Independent ground-truth: returns torch.stack(skips) = (NB, B, SKP, skip_size)."""
    dil_w, dil_b, res_w, res_b, skp_w, skp_b = params
    h = jnp.transpose(x_nct, (0, 2, 1)).astype(jnp.float32)        # (B, T, RES)
    _, Tlen, _ = h.shape
    skips = []
    for i, d in enumerate(DILATIONS):
        # dilated causal conv (kernel_size=2): tap0 at t-d, tap1 at t
        z = _mm(_shift_right(h, d), dil_w[i, 0]) + _mm(h, dil_w[i, 1]) + dil_b[i]
        gated = jnp.tanh(z) * jax.nn.sigmoid(z)
        skip = _mm(gated, skp_w[i]) + skp_b[i]
        h = _mm(gated, res_w[i]) + res_b[i] + h                    # residual add
        skips.append(skip[:, Tlen - skip_size:, :])                # (B, skip_size, SKP)
    stacked = jnp.stack(skips)                                     # (NB, B, skip_size, SKP)
    return jnp.transpose(stacked, (0, 1, 3, 2))                    # (NB, B, SKP, skip_size)


# ----------------------------- Pallas kernel -----------------------------
def residual_stack_kernel(x_ref, w_ref, b_ref, out_ref):
    f32 = jnp.float32
    lane = jax.lax.broadcasted_iota(jnp.int32, (1, NP), 1)
    tmod = lane % T                           # time index within each batch segment

    def shift_t(a, d):
        """Causal right-shift by d along the flattened batch-major time axis.
        Static lane roll (two static slices); the mask zeroes every lane whose
        in-segment time index is < d, providing the causal zero-fill and
        killing wrap-around / cross-batch-segment / padding-lane leakage."""
        if d == 0:
            return a
        rolled = jnp.concatenate([a[:, NP - d:], a[:, :NP - d]], axis=1)
        return jnp.where(tmod >= d, rolled, 0.0)

    def bias(col, rows):
        return b_ref[0:rows, col:col + 1]     # (rows, 1), broadcasts along lanes

    h = x_ref[...]                            # (RES, NP); padding lanes are zero

    for i, d in enumerate(DILATIONS):
        # ---- dilated causal conv: both taps fused into one MXU matmul ----
        cat = jnp.concatenate([shift_t(h, d), h], axis=0)             # (2*RES, NP)
        z = jnp.dot(w_ref[W_DIL0 + i, 0:RES, 0:2 * RES], cat,
                    preferred_element_type=f32) + bias(B_DIL0 + i, RES)
        # ---- gate ----
        gated = jnp.tanh(z) * jax.nn.sigmoid(z)
        # ---- conv_res | conv_skip fused into one MXU matmul, split by rows ----
        y = jnp.dot(w_ref[W_RS0 + i, 0:RES + SKP, 0:RES], gated,
                    preferred_element_type=f32)                        # (RES+SKP, NP)
        h = y[0:RES, :] + bias(B_RES0 + i, RES) + h                    # residual stream
        out_ref[i] = y[RES:RES + SKP, :] + bias(B_SKP0 + i, SKP)       # per-layer skip


# ----------------------------- parameter packing -----------------------------
def pack_params(params):
    """Fuse + pack the per-layer parameter tensors into one weight blob
    (NW, 16, 16) and one bias blob (16, NBIAS) -> only 3 kernel inputs."""
    dil_w, dil_b, res_w, res_b, skp_w, skp_b = params

    def pad_w(w):
        return jnp.zeros((WPAD, WPAD), jnp.float32).at[:w.shape[0], :w.shape[1]].set(w)

    slots = []
    for i in range(NB):                               # dilated conv: tap0 | tap1 fused by cols
        slots.append(pad_w(jnp.concatenate([dil_w[i, 0].T, dil_w[i, 1].T], axis=1)))
    for i in range(NB):                               # conv_res | conv_skip fused by rows
        slots.append(pad_w(jnp.concatenate([res_w[i].T, skp_w[i].T], axis=0)))
    wblob = jnp.stack(slots)                          # (NW, 16, 16)

    def col(v):
        v = v.reshape(-1)
        return jnp.zeros((CPAD,), jnp.float32).at[:v.shape[0]].set(v)

    cols = [col(dil_b[i]) for i in range(NB)]
    cols += [col(res_b[i]) for i in range(NB)]
    cols += [col(skp_b[i]) for i in range(NB)]
    bblob = jnp.stack(cols, axis=1)                   # (CPAD, NBIAS)
    return wblob, bblob


# ----------------------------- wrapper -----------------------------
def residual_stack_forward(x_nct, params, skip_size=SKIP_SIZE):
    """x_nct: PyTorch-style (B, res_channels, T).
    Returns torch.stack(skip_connections): (NB, B, skip_channels, skip_size)."""
    # layout: NCT -> channels-first, time-on-lanes (RES, B*T), zero-padded to NP lanes.
    x_cf = jnp.transpose(x_nct, (1, 0, 2)).reshape(RES, N).astype(jnp.float32)
    x_pad = jnp.zeros((RES, NP), jnp.float32).at[:, :N].set(x_cf)
    wblob, bblob = pack_params(params)

    flops = 2 * NP * NB * (RES * 2 * RES + (RES + SKP) * RES)
    transcendentals = NB * 2 * RES * NP                  # tanh + sigmoid per layer
    bytes_accessed = 4 * (x_pad.size + wblob.size + bblob.size + NB * SKP * NP)

    skips_full = pl.pallas_call(
        residual_stack_kernel,
        out_shape=jax.ShapeDtypeStruct((NB, SKP, NP), jnp.float32),
        in_specs=[pl.BlockSpec(memory_space=pltpu.MemorySpace.VMEM)] * 3,
        out_specs=pl.BlockSpec(memory_space=pltpu.MemorySpace.VMEM),
        cost_estimate=pl.CostEstimate(
            flops=flops, transcendentals=transcendentals,
            bytes_accessed=bytes_accessed),
    )(x_pad, wblob, bblob)

    # torch.stack + the [-skip_size:] tail slice: pure layout, done with static
    # slices on the lane-dense kernel output.
    per_batch = [skips_full[:, :, b * T + T - skip_size: b * T + T] for b in range(B)]
    return jnp.stack(per_batch, axis=1)                  # (NB, B, SKP, skip_size)


# ----------------------------- parameter init -----------------------------
def init_params(key):
    keys = jax.random.split(key, 6)
    scale = 0.2
    # math-friendly (in, out) layouts; pack_params transposes for the kernel's
    # channels-first left-multiplications.
    dil_w = scale * jax.random.normal(keys[0], (NB, K, RES, RES), jnp.float32)
    dil_b = scale * jax.random.normal(keys[1], (NB, 1, 1, RES), jnp.float32)
    res_w = scale * jax.random.normal(keys[2], (NB, RES, RES), jnp.float32)
    res_b = scale * jax.random.normal(keys[3], (NB, 1, 1, RES), jnp.float32)
    skp_w = scale * jax.random.normal(keys[4], (NB, RES, SKP), jnp.float32)
    skp_b = scale * jax.random.normal(keys[5], (NB, 1, 1, SKP), jnp.float32)
    return (dil_w, dil_b, res_w, res_b, skp_w, skp_b)


# ----------------------------- main -----------------------------
if __name__ == "__main__":
    key = jax.random.PRNGKey(0)
    kx, kp = jax.random.split(key)
    x = jax.random.normal(kx, (B, RES, T), jnp.float32)
    params = init_params(kp)

    out = residual_stack_forward(x, params, SKIP_SIZE)
    out = jax.block_until_ready(out)

    ref = reference_forward(x, params, SKIP_SIZE)
    assert out.shape == (NB, B, SKP, SKIP_SIZE), out.shape
    assert jnp.allclose(out, ref, atol=2e-4, rtol=2e-4), (out, ref)
    print("KERNEL_OK")
</pallas_src>

<mosaic_0001>
module attributes {stable_mosaic.version = 11 : i64} {
  func.func @residual_stack_kernel(%arg0: memref<8x128xf32, #tpu.memory_space<vmem>>, %arg1: memref<12x16x16xf32, #tpu.memory_space<vmem>>, %arg2: memref<16x18xf32, #tpu.memory_space<vmem>>, %arg3: memref<6x8x128xf32, #tpu.memory_space<vmem>>) attributes {dimension_semantics = [], scalar_prefetch = 0 : i64, scratch_operands = 0 : i64, tpu.core_type = #tpu.core_type<tc>} {
    %0 = tpu.iota {dimensions = array<i32: 1>} : vector<1x128xi32>
    %c32_i32 = arith.constant 32 : i32
    %c0_i32 = arith.constant 0 : i32
    %1 = arith.cmpi eq, %c32_i32, %c0_i32 : i32
    %c1_i32 = arith.constant 1 : i32
    %2 = arith.select %1, %c1_i32, %c32_i32 : i32
    %3 = vector.broadcast %2 : i32 to vector<1x128xi32>
    %4 = arith.remsi %0, %3 : vector<1x128xi32>
    %c0_i32_0 = arith.constant 0 : i32
    %5 = vector.broadcast %c0_i32_0 : i32 to vector<1x128xi32>
    %6 = arith.cmpi ne, %4, %5 : vector<1x128xi32>
    %c0_i32_1 = arith.constant 0 : i32
    %7 = vector.broadcast %c0_i32_1 : i32 to vector<1x128xi32>
    %8 = arith.cmpi slt, %4, %7 : vector<1x128xi32>
    %c0_i32_2 = arith.constant 0 : i32
    %9 = arith.cmpi slt, %2, %c0_i32_2 : i32
    %10 = vector.broadcast %9 : i1 to vector<1x128xi1>
    %11 = vector.broadcast %10 : vector<1x128xi1> to vector<1x128xi1>
    %12 = arith.xori %8, %11 : vector<1x128xi1>
    %13 = arith.andi %12, %6 : vector<1x128xi1>
    %14 = vector.broadcast %2 : i32 to vector<1x128xi32>
    %15 = arith.addi %4, %14 : vector<1x128xi32>
    %16 = arith.select %13, %15, %4 : vector<1x128xi1>, vector<1x128xi32>
    %c0 = arith.constant 0 : index
    %c0_3 = arith.constant 0 : index
    %17 = vector.load %arg0[%c0, %c0_3] : memref<8x128xf32, #tpu.memory_space<vmem>>, vector<8x128xf32>
    %18 = vector.extract_strided_slice %17 {offsets = [0, 127], sizes = [8, 1], strides = [1, 1]} : vector<8x128xf32> to vector<8x1xf32>
    %19 = vector.extract_strided_slice %17 {offsets = [0, 0], sizes = [8, 127], strides = [1, 1]} : vector<8x128xf32> to vector<8x127xf32>
    %20 = tpu.concatenate %18, %19 in 1 : vector<8x1xf32>, vector<8x127xf32> -> vector<8x128xf32>
    %c1_i32_4 = arith.constant 1 : i32
    %21 = vector.broadcast %c1_i32_4 : i32 to vector<1x128xi32>
    %22 = arith.cmpi sge, %16, %21 : vector<1x128xi32>
    %cst = arith.constant 0.000000e+00 : f32
    %23 = vector.shape_cast %22 : vector<1x128xi1> to vector<1x128xi1>
    %24 = vector.broadcast %23 : vector<1x128xi1> to vector<8x128xi1>
    %25 = vector.broadcast %cst : f32 to vector<8x128xf32>
    %26 = arith.select %24, %20, %25 : vector<8x128xi1>, vector<8x128xf32>
    %27 = tpu.concatenate %26, %17 in 0 : vector<8x128xf32>, vector<8x128xf32> -> vector<16x128xf32>
    %c0_5 = arith.constant 0 : index
    %c0_6 = arith.constant 0 : index
    %c0_7 = arith.constant 0 : index
    %28 = vector.load %arg1[%c0_5, %c0_6, %c0_7] : memref<12x16x16xf32, #tpu.memory_space<vmem>>, vector<1x8x16xf32>
    %29 = vector.shape_cast %28 : vector<1x8x16xf32> to vector<8x16xf32>
    %cst_8 = arith.constant dense<0.000000e+00> : vector<8x128xf32>
    %30 = tpu.matmul %29, %27, %cst_8 {dimension_numbers = #tpu.dot_dimension_numbers<[1], [0], [0], [1], [0, 0, 1, 1], [], []>} : vector<8x16xf32>, vector<16x128xf32>, vector<8x128xf32> -> vector<8x128xf32>
    %c0_9 = arith.constant 0 : index
    %c0_10 = arith.constant 0 : index
    %31 = vector.load %arg2[%c0_9, %c0_10] : memref<16x18xf32, #tpu.memory_space<vmem>>, vector<8x1xf32>
    %32 = vector.broadcast %31 : vector<8x1xf32> to vector<8x128xf32>
    %33 = arith.addf %30, %32 : vector<8x128xf32>
    %34 = math.tanh %33 : vector<8x128xf32>
    %35 = arith.negf %33 : vector<8x128xf32>
    %36 = math.exp %35 : vector<8x128xf32>
    %cst_11 = arith.constant 1.000000e+00 : f32
    %37 = vector.broadcast %cst_11 : f32 to vector<8x128xf32>
    %38 = arith.addf %37, %36 : vector<8x128xf32>
    %39 = arith.divf %37, %38 : vector<8x128xf32>
    %40 = arith.mulf %34, %39 : vector<8x128xf32>
    %c6 = arith.constant 6 : index
    %c0_12 = arith.constant 0 : index
    %c0_13 = arith.constant 0 : index
    %41 = vector.load %arg1[%c6, %c0_12, %c0_13] : memref<12x16x16xf32, #tpu.memory_space<vmem>>, vector<1x16x8xf32>
    %42 = vector.shape_cast %41 : vector<1x16x8xf32> to vector<16x8xf32>
    %cst_14 = arith.constant dense<0.000000e+00> : vector<16x128xf32>
    %43 = tpu.matmul %42, %40, %cst_14 {dimension_numbers = #tpu.dot_dimension_numbers<[1], [0], [0], [1], [0, 0, 1, 1], [], []>} : vector<16x8xf32>, vector<8x128xf32>, vector<16x128xf32> -> vector<16x128xf32>
    %44 = vector.extract_strided_slice %43 {offsets = [0, 0], sizes = [8, 128], strides = [1, 1]} : vector<16x128xf32> to vector<8x128xf32>
    %c0_15 = arith.constant 0 : index
    %c6_16 = arith.constant 6 : index
    %45 = vector.load %arg2[%c0_15, %c6_16] : memref<16x18xf32, #tpu.memory_space<vmem>>, vector<8x1xf32>
    %46 = vector.broadcast %45 : vector<8x1xf32> to vector<8x128xf32>
    %47 = arith.addf %44, %46 : vector<8x128xf32>
    %48 = arith.addf %47, %17 : vector<8x128xf32>
    %49 = vector.extract_strided_slice %43 {offsets = [8, 0], sizes = [8, 128], strides = [1, 1]} : vector<16x128xf32> to vector<8x128xf32>
    %c0_17 = arith.constant 0 : index
    %c12 = arith.constant 12 : index
    %50 = vector.load %arg2[%c0_17, %c12] : memref<16x18xf32, #tpu.memory_space<vmem>>, vector<8x1xf32>
    %51 = vector.broadcast %50 : vector<8x1xf32> to vector<8x128xf32>
    %52 = arith.addf %49, %51 : vector<8x128xf32>
    %c0_18 = arith.constant 0 : index
    %c0_19 = arith.constant 0 : index
    %c0_20 = arith.constant 0 : index
    %53 = vector.load %arg3[%c0_18, %c0_19, %c0_20] : memref<6x8x128xf32, #tpu.memory_space<vmem>>, vector<1x8x128xf32>
    %54 = vector.shape_cast %53 : vector<1x8x128xf32> to vector<8x128xf32>
    %55 = vector.shape_cast %52 : vector<8x128xf32> to vector<1x8x128xf32>
    tpu.vector_store %arg3[%c0_18, %c0_19, %c0_20], %55 {strides = array<i32>} : memref<6x8x128xf32, #tpu.memory_space<vmem>>, vector<1x8x128xf32>,
    %56 = vector.extract_strided_slice %48 {offsets = [0, 126], sizes = [8, 2], strides = [1, 1]} : vector<8x128xf32> to vector<8x2xf32>
    %57 = vector.extract_strided_slice %48 {offsets = [0, 0], sizes = [8, 126], strides = [1, 1]} : vector<8x128xf32> to vector<8x126xf32>
    %58 = tpu.concatenate %56, %57 in 1 : vector<8x2xf32>, vector<8x126xf32> -> vector<8x128xf32>
    %c2_i32 = arith.constant 2 : i32
    %59 = vector.broadcast %c2_i32 : i32 to vector<1x128xi32>
    %60 = arith.cmpi sge, %16, %59 : vector<1x128xi32>
    %cst_21 = arith.constant 0.000000e+00 : f32
    %61 = vector.shape_cast %60 : vector<1x128xi1> to vector<1x128xi1>
    %62 = vector.broadcast %61 : vector<1x128xi1> to vector<8x128xi1>
    %63 = vector.broadcast %cst_21 : f32 to vector<8x128xf32>
    %64 = arith.select %62, %58, %63 : vector<8x128xi1>, vector<8x128xf32>
    %65 = tpu.concatenate %64, %48 in 0 : vector<8x128xf32>, vector<8x128xf32> -> vector<16x128xf32>
    %c1 = arith.constant 1 : index
    %c0_22 = arith.constant 0 : index
    %c0_23 = arith.constant 0 : index
    %66 = vector.load %arg1[%c1, %c0_22, %c0_23] : memref<12x16x16xf32, #tpu.memory_space<vmem>>, vector<1x8x16xf32>
    %67 = vector.shape_cast %66 : vector<1x8x16xf32> to vector<8x16xf32>
    %cst_24 = arith.constant dense<0.000000e+00> : vector<8x128xf32>
    %68 = tpu.matmul %67, %65, %cst_24 {dimension_numbers = #tpu.dot_dimension_numbers<[1], [0], [0], [1], [0, 0, 1, 1], [], []>} : vector<8x16xf32>, vector<16x128xf32>, vector<8x128xf32> -> vector<8x128xf32>
    %c0_25 = arith.constant 0 : index
    %c1_26 = arith.constant 1 : index
    %69 = vector.load %arg2[%c0_25, %c1_26] : memref<16x18xf32, #tpu.memory_space<vmem>>, vector<8x1xf32>
    %70 = vector.broadcast %69 : vector<8x1xf32> to vector<8x128xf32>
    %71 = arith.addf %68, %70 : vector<8x128xf32>
    %72 = math.tanh %71 : vector<8x128xf32>
    %73 = arith.negf %71 : vector<8x128xf32>
    %74 = math.exp %73 : vector<8x128xf32>
    %cst_27 = arith.constant 1.000000e+00 : f32
    %75 = vector.broadcast %cst_27 : f32 to vector<8x128xf32>
    %76 = arith.addf %75, %74 : vector<8x128xf32>
    %77 = arith.divf %75, %76 : vector<8x128xf32>
    %78 = arith.mulf %72, %77 : vector<8x128xf32>
    %c7 = arith.constant 7 : index
    %c0_28 = arith.constant 0 : index
    %c0_29 = arith.constant 0 : index
    %79 = vector.load %arg1[%c7, %c0_28, %c0_29] : memref<12x16x16xf32, #tpu.memory_space<vmem>>, vector<1x16x8xf32>
    %80 = vector.shape_cast %79 : vector<1x16x8xf32> to vector<16x8xf32>
    %cst_30 = arith.constant dense<0.000000e+00> : vector<16x128xf32>
    %81 = tpu.matmul %80, %78, %cst_30 {dimension_numbers = #tpu.dot_dimension_numbers<[1], [0], [0], [1], [0, 0, 1, 1], [], []>} : vector<16x8xf32>, vector<8x128xf32>, vector<16x128xf32> -> vector<16x128xf32>
    %82 = vector.extract_strided_slice %81 {offsets = [0, 0], sizes = [8, 128], strides = [1, 1]} : vector<16x128xf32> to vector<8x128xf32>
    %c0_31 = arith.constant 0 : index
    %c7_32 = arith.constant 7 : index
    %83 = vector.load %arg2[%c0_31, %c7_32] : memref<16x18xf32, #tpu.memory_space<vmem>>, vector<8x1xf32>
    %84 = vector.broadcast %83 : vector<8x1xf32> to vector<8x128xf32>
    %85 = arith.addf %82, %84 : vector<8x128xf32>
    %86 = arith.addf %85, %48 : vector<8x128xf32>
    %87 = vector.extract_strided_slice %81 {offsets = [8, 0], sizes = [8, 128], strides = [1, 1]} : vector<16x128xf32> to vector<8x128xf32>
    %c0_33 = arith.constant 0 : index
    %c13 = arith.constant 13 : index
    %88 = vector.load %arg2[%c0_33, %c13] : memref<16x18xf32, #tpu.memory_space<vmem>>, vector<8x1xf32>
    %89 = vector.broadcast %88 : vector<8x1xf32> to vector<8x128xf32>
    %90 = arith.addf %87, %89 : vector<8x128xf32>
    %c1_34 = arith.constant 1 : index
    %c0_35 = arith.constant 0 : index
    %c0_36 = arith.constant 0 : index
    %91 = vector.load %arg3[%c1_34, %c0_35, %c0_36] : memref<6x8x128xf32, #tpu.memory_space<vmem>>, vector<1x8x128xf32>
    %92 = vector.shape_cast %91 : vector<1x8x128xf32> to vector<8x128xf32>
    %93 = vector.shape_cast %90 : vector<8x128xf32> to vector<1x8x128xf32>
    tpu.vector_store %arg3[%c1_34, %c0_35, %c0_36], %93 {strides = array<i32>} : memref<6x8x128xf32, #tpu.memory_space<vmem>>, vector<1x8x128xf32>,
    %94 = vector.extract_strided_slice %86 {offsets = [0, 124], sizes = [8, 4], strides = [1, 1]} : vector<8x128xf32> to vector<8x4xf32>
    %95 = vector.extract_strided_slice %86 {offsets = [0, 0], sizes = [8, 124], strides = [1, 1]} : vector<8x128xf32> to vector<8x124xf32>
    %96 = tpu.concatenate %94, %95 in 1 : vector<8x4xf32>, vector<8x124xf32> -> vector<8x128xf32>
    %c4_i32 = arith.constant 4 : i32
    %97 = vector.broadcast %c4_i32 : i32 to vector<1x128xi32>
    %98 = arith.cmpi sge, %16, %97 : vector<1x128xi32>
    %cst_37 = arith.constant 0.000000e+00 : f32
    %99 = vector.shape_cast %98 : vector<1x128xi1> to vector<1x128xi1>
    %100 = vector.broadcast %99 : vector<1x128xi1> to vector<8x128xi1>
    %101 = vector.broadcast %cst_37 : f32 to vector<8x128xf32>
    %102 = arith.select %100, %96, %101 : vector<8x128xi1>, vector<8x128xf32>
    %103 = tpu.concatenate %102, %86 in 0 : vector<8x128xf32>, vector<8x128xf32> -> vector<16x128xf32>
    %c2 = arith.constant 2 : index
    %c0_38 = arith.constant 0 : index
    %c0_39 = arith.constant 0 : index
    %104 = vector.load %arg1[%c2, %c0_38, %c0_39] : memref<12x16x16xf32, #tpu.memory_space<vmem>>, vector<1x8x16xf32>
    %105 = vector.shape_cast %104 : vector<1x8x16xf32> to vector<8x16xf32>
    %cst_40 = arith.constant dense<0.000000e+00> : vector<8x128xf32>
    %106 = tpu.matmul %105, %103, %cst_40 {dimension_numbers = #tpu.dot_dimension_numbers<[1], [0], [0], [1], [0, 0, 1, 1], [], []>} : vector<8x16xf32>, vector<16x128xf32>, vector<8x128xf32> -> vector<8x128xf32>
    %c0_41 = arith.constant 0 : index
    %c2_42 = arith.constant 2 : index
    %107 = vector.load %arg2[%c0_41, %c2_42] : memref<16x18xf32, #tpu.memory_space<vmem>>, vector<8x1xf32>
    %108 = vector.broadcast %107 : vector<8x1xf32> to vector<8x128xf32>
    %109 = arith.addf %106, %108 : vector<8x128xf32>
    %110 = math.tanh %109 : vector<8x128xf32>
    %111 = arith.negf %109 : vector<8x128xf32>
    %112 = math.exp %111 : vector<8x128xf32>
    %cst_43 = arith.constant 1.000000e+00 : f32
    %113 = vector.broadcast %cst_43 : f32 to vector<8x128xf32>
    %114 = arith.addf %113, %112 : vector<8x128xf32>
    %115 = arith.divf %113, %114 : vector<8x128xf32>
    %116 = arith.mulf %110, %115 : vector<8x128xf32>
    %c8 = arith.constant 8 : index
    %c0_44 = arith.constant 0 : index
    %c0_45 = arith.constant 0 : index
    %117 = vector.load %arg1[%c8, %c0_44, %c0_45] : memref<12x16x16xf32, #tpu.memory_space<vmem>>, vector<1x16x8xf32>
    %118 = vector.shape_cast %117 : vector<1x16x8xf32> to vector<16x8xf32>
    %cst_46 = arith.constant dense<0.000000e+00> : vector<16x128xf32>
    %119 = tpu.matmul %118, %116, %cst_46 {dimension_numbers = #tpu.dot_dimension_numbers<[1], [0], [0], [1], [0, 0, 1, 1], [], []>} : vector<16x8xf32>, vector<8x128xf32>, vector<16x128xf32> -> vector<16x128xf32>
    %120 = vector.extract_strided_slice %119 {offsets = [0, 0], sizes = [8, 128], strides = [1, 1]} : vector<16x128xf32> to vector<8x128xf32>
    %c0_47 = arith.constant 0 : index
    %c8_48 = arith.constant 8 : index
    %121 = vector.load %arg2[%c0_47, %c8_48] : memref<16x18xf32, #tpu.memory_space<vmem>>, vector<8x1xf32>
    %122 = vector.broadcast %121 : vector<8x1xf32> to vector<8x128xf32>
    %123 = arith.addf %120, %122 : vector<8x128xf32>
    %124 = arith.addf %123, %86 : vector<8x128xf32>
    %125 = vector.extract_strided_slice %119 {offsets = [8, 0], sizes = [8, 128], strides = [1, 1]} : vector<16x128xf32> to vector<8x128xf32>
    %c0_49 = arith.constant 0 : index
    %c14 = arith.constant 14 : index
    %126 = vector.load %arg2[%c0_49, %c14] : memref<16x18xf32, #tpu.memory_space<vmem>>, vector<8x1xf32>
    %127 = vector.broadcast %126 : vector<8x1xf32> to vector<8x128xf32>
    %128 = arith.addf %125, %127 : vector<8x128xf32>
    %c2_50 = arith.constant 2 : index
    %c0_51 = arith.constant 0 : index
    %c0_52 = arith.constant 0 : index
    %129 = vector.load %arg3[%c2_50, %c0_51, %c0_52] : memref<6x8x128xf32, #tpu.memory_space<vmem>>, vector<1x8x128xf32>
    %130 = vector.shape_cast %129 : vector<1x8x128xf32> to vector<8x128xf32>
    %131 = vector.shape_cast %128 : vector<8x128xf32> to vector<1x8x128xf32>
    tpu.vector_store %arg3[%c2_50, %c0_51, %c0_52], %131 {strides = array<i32>} : memref<6x8x128xf32, #tpu.memory_space<vmem>>, vector<1x8x128xf32>,
    %132 = vector.extract_strided_slice %124 {offsets = [0, 127], sizes = [8, 1], strides = [1, 1]} : vector<8x128xf32> to vector<8x1xf32>
    %133 = vector.extract_strided_slice %124 {offsets = [0, 0], sizes = [8, 127], strides = [1, 1]} : vector<8x128xf32> to vector<8x127xf32>
    %134 = tpu.concatenate %132, %133 in 1 : vector<8x1xf32>, vector<8x127xf32> -> vector<8x128xf32>
    %c1_i32_53 = arith.constant 1 : i32
    %135 = vector.broadcast %c1_i32_53 : i32 to vector<1x128xi32>
    %136 = arith.cmpi sge, %16, %135 : vector<1x128xi32>
    %cst_54 = arith.constant 0.000000e+00 : f32
    %137 = vector.shape_cast %136 : vector<1x128xi1> to vector<1x128xi1>
    %138 = vector.broadcast %137 : vector<1x128xi1> to vector<8x128xi1>
    %139 = vector.broadcast %cst_54 : f32 to vector<8x128xf32>
    %140 = arith.select %138, %134, %139 : vector<8x128xi1>, vector<8x128xf32>
    %141 = tpu.concatenate %140, %124 in 0 : vector<8x128xf32>, vector<8x128xf32> -> vector<16x128xf32>
    %c3 = arith.constant 3 : index
    %c0_55 = arith.constant 0 : index
    %c0_56 = arith.constant 0 : index
    %142 = vector.load %arg1[%c3, %c0_55, %c0_56] : memref<12x16x16xf32, #tpu.memory_space<vmem>>, vector<1x8x16xf32>
    %143 = vector.shape_cast %142 : vector<1x8x16xf32> to vector<8x16xf32>
    %cst_57 = arith.constant dense<0.000000e+00> : vector<8x128xf32>
    %144 = tpu.matmul %143, %141, %cst_57 {dimension_numbers = #tpu.dot_dimension_numbers<[1], [0], [0], [1], [0, 0, 1, 1], [], []>} : vector<8x16xf32>, vector<16x128xf32>, vector<8x128xf32> -> vector<8x128xf32>
    %c0_58 = arith.constant 0 : index
    %c3_59 = arith.constant 3 : index
    %145 = vector.load %arg2[%c0_58, %c3_59] : memref<16x18xf32, #tpu.memory_space<vmem>>, vector<8x1xf32>
    %146 = vector.broadcast %145 : vector<8x1xf32> to vector<8x128xf32>
    %147 = arith.addf %144, %146 : vector<8x128xf32>
    %148 = math.tanh %147 : vector<8x128xf32>
    %149 = arith.negf %147 : vector<8x128xf32>
    %150 = math.exp %149 : vector<8x128xf32>
    %cst_60 = arith.constant 1.000000e+00 : f32
    %151 = vector.broadcast %cst_60 : f32 to vector<8x128xf32>
    %152 = arith.addf %151, %150 : vector<8x128xf32>
    %153 = arith.divf %151, %152 : vector<8x128xf32>
    %154 = arith.mulf %148, %153 : vector<8x128xf32>
    %c9 = arith.constant 9 : index
    %c0_61 = arith.constant 0 : index
    %c0_62 = arith.constant 0 : index
    %155 = vector.load %arg1[%c9, %c0_61, %c0_62] : memref<12x16x16xf32, #tpu.memory_space<vmem>>, vector<1x16x8xf32>
    %156 = vector.shape_cast %155 : vector<1x16x8xf32> to vector<16x8xf32>
    %cst_63 = arith.constant dense<0.000000e+00> : vector<16x128xf32>
    %157 = tpu.matmul %156, %154, %cst_63 {dimension_numbers = #tpu.dot_dimension_numbers<[1], [0], [0], [1], [0, 0, 1, 1], [], []>} : vector<16x8xf32>, vector<8x128xf32>, vector<16x128xf32> -> vector<16x128xf32>
    %158 = vector.extract_strided_slice %157 {offsets = [0, 0], sizes = [8, 128], strides = [1, 1]} : vector<16x128xf32> to vector<8x128xf32>
    %c0_64 = arith.constant 0 : index
    %c9_65 = arith.constant 9 : index
    %159 = vector.load %arg2[%c0_64, %c9_65] : memref<16x18xf32, #tpu.memory_space<vmem>>, vector<8x1xf32>
    %160 = vector.broadcast %159 : vector<8x1xf32> to vector<8x128xf32>
    %161 = arith.addf %158, %160 : vector<8x128xf32>
    %162 = arith.addf %161, %124 : vector<8x128xf32>
    %163 = vector.extract_strided_slice %157 {offsets = [8, 0], sizes = [8, 128], strides = [1, 1]} : vector<16x128xf32> to vector<8x128xf32>
    %c0_66 = arith.constant 0 : index
    %c15 = arith.constant 15 : index
    %164 = vector.load %arg2[%c0_66, %c15] : memref<16x18xf32, #tpu.memory_space<vmem>>, vector<8x1xf32>
    %165 = vector.broadcast %164 : vector<8x1xf32> to vector<8x128xf32>
    %166 = arith.addf %163, %165 : vector<8x128xf32>
    %c3_67 = arith.constant 3 : index
    %c0_68 = arith.constant 0 : index
    %c0_69 = arith.constant 0 : index
    %167 = vector.load %arg3[%c3_67, %c0_68, %c0_69] : memref<6x8x128xf32, #tpu.memory_space<vmem>>, vector<1x8x128xf32>
    %168 = vector.shape_cast %167 : vector<1x8x128xf32> to vector<8x128xf32>
    %169 = vector.shape_cast %166 : vector<8x128xf32> to vector<1x8x128xf32>
    tpu.vector_store %arg3[%c3_67, %c0_68, %c0_69], %169 {strides = array<i32>} : memref<6x8x128xf32, #tpu.memory_space<vmem>>, vector<1x8x128xf32>,
    %170 = vector.extract_strided_slice %162 {offsets = [0, 126], sizes = [8, 2], strides = [1, 1]} : vector<8x128xf32> to vector<8x2xf32>
    %171 = vector.extract_strided_slice %162 {offsets = [0, 0], sizes = [8, 126], strides = [1, 1]} : vector<8x128xf32> to vector<8x126xf32>
    %172 = tpu.concatenate %170, %171 in 1 : vector<8x2xf32>, vector<8x126xf32> -> vector<8x128xf32>
    %c2_i32_70 = arith.constant 2 : i32
    %173 = vector.broadcast %c2_i32_70 : i32 to vector<1x128xi32>
    %174 = arith.cmpi sge, %16, %173 : vector<1x128xi32>
    %cst_71 = arith.constant 0.000000e+00 : f32
    %175 = vector.shape_cast %174 : vector<1x128xi1> to vector<1x128xi1>
    %176 = vector.broadcast %175 : vector<1x128xi1> to vector<8x128xi1>
    %177 = vector.broadcast %cst_71 : f32 to vector<8x128xf32>
    %178 = arith.select %176, %172, %177 : vector<8x128xi1>, vector<8x128xf32>
    %179 = tpu.concatenate %178, %162 in 0 : vector<8x128xf32>, vector<8x128xf32> -> vector<16x128xf32>
    %c4 = arith.constant 4 : index
    %c0_72 = arith.constant 0 : index
    %c0_73 = arith.constant 0 : index
    %180 = vector.load %arg1[%c4, %c0_72, %c0_73] : memref<12x16x16xf32, #tpu.memory_space<vmem>>, vector<1x8x16xf32>
    %181 = vector.shape_cast %180 : vector<1x8x16xf32> to vector<8x16xf32>
    %cst_74 = arith.constant dense<0.000000e+00> : vector<8x128xf32>
    %182 = tpu.matmul %181, %179, %cst_74 {dimension_numbers = #tpu.dot_dimension_numbers<[1], [0], [0], [1], [0, 0, 1, 1], [], []>} : vector<8x16xf32>, vector<16x128xf32>, vector<8x128xf32> -> vector<8x128xf32>
    %c0_75 = arith.constant 0 : index
    %c4_76 = arith.constant 4 : index
    %183 = vector.load %arg2[%c0_75, %c4_76] : memref<16x18xf32, #tpu.memory_space<vmem>>, vector<8x1xf32>
    %184 = vector.broadcast %183 : vector<8x1xf32> to vector<8x128xf32>
    %185 = arith.addf %182, %184 : vector<8x128xf32>
    %186 = math.tanh %185 : vector<8x128xf32>
    %187 = arith.negf %185 : vector<8x128xf32>
    %188 = math.exp %187 : vector<8x128xf32>
    %cst_77 = arith.constant 1.000000e+00 : f32
    %189 = vector.broadcast %cst_77 : f32 to vector<8x128xf32>
    %190 = arith.addf %189, %188 : vector<8x128xf32>
    %191 = arith.divf %189, %190 : vector<8x128xf32>
    %192 = arith.mulf %186, %191 : vector<8x128xf32>
    %c10 = arith.constant 10 : index
    %c0_78 = arith.constant 0 : index
    %c0_79 = arith.constant 0 : index
    %193 = vector.load %arg1[%c10, %c0_78, %c0_79] : memref<12x16x16xf32, #tpu.memory_space<vmem>>, vector<1x16x8xf32>
    %194 = vector.shape_cast %193 : vector<1x16x8xf32> to vector<16x8xf32>
    %cst_80 = arith.constant dense<0.000000e+00> : vector<16x128xf32>
    %195 = tpu.matmul %194, %192, %cst_80 {dimension_numbers = #tpu.dot_dimension_numbers<[1], [0], [0], [1], [0, 0, 1, 1], [], []>} : vector<16x8xf32>, vector<8x128xf32>, vector<16x128xf32> -> vector<16x128xf32>
    %196 = vector.extract_strided_slice %195 {offsets = [0, 0], sizes = [8, 128], strides = [1, 1]} : vector<16x128xf32> to vector<8x128xf32>
    %c0_81 = arith.constant 0 : index
    %c10_82 = arith.constant 10 : index
    %197 = vector.load %arg2[%c0_81, %c10_82] : memref<16x18xf32, #tpu.memory_space<vmem>>, vector<8x1xf32>
    %198 = vector.broadcast %197 : vector<8x1xf32> to vector<8x128xf32>
    %199 = arith.addf %196, %198 : vector<8x128xf32>
    %200 = arith.addf %199, %162 : vector<8x128xf32>
    %201 = vector.extract_strided_slice %195 {offsets = [8, 0], sizes = [8, 128], strides = [1, 1]} : vector<16x128xf32> to vector<8x128xf32>
    %c0_83 = arith.constant 0 : index
    %c16 = arith.constant 16 : index
    %202 = vector.load %arg2[%c0_83, %c16] : memref<16x18xf32, #tpu.memory_space<vmem>>, vector<8x1xf32>
    %203 = vector.broadcast %202 : vector<8x1xf32> to vector<8x128xf32>
    %204 = arith.addf %201, %203 : vector<8x128xf32>
    %c4_84 = arith.constant 4 : index
    %c0_85 = arith.constant 0 : index
    %c0_86 = arith.constant 0 : index
    %205 = vector.load %arg3[%c4_84, %c0_85, %c0_86] : memref<6x8x128xf32, #tpu.memory_space<vmem>>, vector<1x8x128xf32>
    %206 = vector.shape_cast %205 : vector<1x8x128xf32> to vector<8x128xf32>
    %207 = vector.shape_cast %204 : vector<8x128xf32> to vector<1x8x128xf32>
    tpu.vector_store %arg3[%c4_84, %c0_85, %c0_86], %207 {strides = array<i32>} : memref<6x8x128xf32, #tpu.memory_space<vmem>>, vector<1x8x128xf32>,
    %208 = vector.extract_strided_slice %200 {offsets = [0, 124], sizes = [8, 4], strides = [1, 1]} : vector<8x128xf32> to vector<8x4xf32>
    %209 = vector.extract_strided_slice %200 {offsets = [0, 0], sizes = [8, 124], strides = [1, 1]} : vector<8x128xf32> to vector<8x124xf32>
    %210 = tpu.concatenate %208, %209 in 1 : vector<8x4xf32>, vector<8x124xf32> -> vector<8x128xf32>
    %c4_i32_87 = arith.constant 4 : i32
    %211 = vector.broadcast %c4_i32_87 : i32 to vector<1x128xi32>
    %212 = arith.cmpi sge, %16, %211 : vector<1x128xi32>
    %cst_88 = arith.constant 0.000000e+00 : f32
    %213 = vector.shape_cast %212 : vector<1x128xi1> to vector<1x128xi1>
    %214 = vector.broadcast %213 : vector<1x128xi1> to vector<8x128xi1>
    %215 = vector.broadcast %cst_88 : f32 to vector<8x128xf32>
    %216 = arith.select %214, %210, %215 : vector<8x128xi1>, vector<8x128xf32>
    %217 = tpu.concatenate %216, %200 in 0 : vector<8x128xf32>, vector<8x128xf32> -> vector<16x128xf32>
    %c5 = arith.constant 5 : index
    %c0_89 = arith.constant 0 : index
    %c0_90 = arith.constant 0 : index
    %218 = vector.load %arg1[%c5, %c0_89, %c0_90] : memref<12x16x16xf32, #tpu.memory_space<vmem>>, vector<1x8x16xf32>
    %219 = vector.shape_cast %218 : vector<1x8x16xf32> to vector<8x16xf32>
    %cst_91 = arith.constant dense<0.000000e+00> : vector<8x128xf32>
    %220 = tpu.matmul %219, %217, %cst_91 {dimension_numbers = #tpu.dot_dimension_numbers<[1], [0], [0], [1], [0, 0, 1, 1], [], []>} : vector<8x16xf32>, vector<16x128xf32>, vector<8x128xf32> -> vector<8x128xf32>
    %c0_92 = arith.constant 0 : index
    %c5_93 = arith.constant 5 : index
    %221 = vector.load %arg2[%c0_92, %c5_93] : memref<16x18xf32, #tpu.memory_space<vmem>>, vector<8x1xf32>
    %222 = vector.broadcast %221 : vector<8x1xf32> to vector<8x128xf32>
    %223 = arith.addf %220, %222 : vector<8x128xf32>
    %224 = math.tanh %223 : vector<8x128xf32>
    %225 = arith.negf %223 : vector<8x128xf32>
    %226 = math.exp %225 : vector<8x128xf32>
    %cst_94 = arith.constant 1.000000e+00 : f32
    %227 = vector.broadcast %cst_94 : f32 to vector<8x128xf32>
    %228 = arith.addf %227, %226 : vector<8x128xf32>
    %229 = arith.divf %227, %228 : vector<8x128xf32>
    %230 = arith.mulf %224, %229 : vector<8x128xf32>
    %c11 = arith.constant 11 : index
    %c0_95 = arith.constant 0 : index
    %c0_96 = arith.constant 0 : index
    %231 = vector.load %arg1[%c11, %c0_95, %c0_96] : memref<12x16x16xf32, #tpu.memory_space<vmem>>, vector<1x16x8xf32>
    %232 = vector.shape_cast %231 : vector<1x16x8xf32> to vector<16x8xf32>
    %cst_97 = arith.constant dense<0.000000e+00> : vector<16x128xf32>
    %233 = tpu.matmul %232, %230, %cst_97 {dimension_numbers = #tpu.dot_dimension_numbers<[1], [0], [0], [1], [0, 0, 1, 1], [], []>} : vector<16x8xf32>, vector<8x128xf32>, vector<16x128xf32> -> vector<16x128xf32>
    %234 = vector.extract_strided_slice %233 {offsets = [8, 0], sizes = [8, 128], strides = [1, 1]} : vector<16x128xf32> to vector<8x128xf32>
    %c0_98 = arith.constant 0 : index
    %c17 = arith.constant 17 : index
    %235 = vector.load %arg2[%c0_98, %c17] : memref<16x18xf32, #tpu.memory_space<vmem>>, vector<8x1xf32>
    %236 = vector.broadcast %235 : vector<8x1xf32> to vector<8x128xf32>
    %237 = arith.addf %234, %236 : vector<8x128xf32>
    %c5_99 = arith.constant 5 : index
    %c0_100 = arith.constant 0 : index
    %c0_101 = arith.constant 0 : index
    %238 = vector.load %arg3[%c5_99, %c0_100, %c0_101] : memref<6x8x128xf32, #tpu.memory_space<vmem>>, vector<1x8x128xf32>
    %239 = vector.shape_cast %238 : vector<1x8x128xf32> to vector<8x128xf32>
    %240 = vector.shape_cast %237 : vector<8x128xf32> to vector<1x8x128xf32>
    tpu.vector_store %arg3[%c5_99, %c0_100, %c0_101], %240 {strides = array<i32>} : memref<6x8x128xf32, #tpu.memory_space<vmem>>, vector<1x8x128xf32>,
    return
  }
}

</mosaic_0001>

<llo_original>
// kernel: tpu_custom_call.1
$region0: #{tpu_custom_call.1}
  #allocation0 [shape = 'u32[]', space=smem, size = 0x4, offset = 0x4, fixed_abs, tag = 'smem constant byte address 0x4 - core index']
  #allocation1 [shape = 'u32[144,128]{1,0:T(1,128)}', space=vmem, size = 0x12000, scoped, tag = 'internal scratch']
  %s0 = inlined_call_operand.hbm [shape: f32[8,128], index: 0, kind: input, shape index: {}]
  %s1 = inlined_call_operand.hbm [shape: f32[12,16,16], index: 1, kind: input, shape index: {}]
  %s2 = inlined_call_operand.hbm [shape: f32[16,18], index: 2, kind: input, shape index: {}]
  %s3 = inlined_call_operand.hbm [shape: f32[6,8,128], index: 3, kind: output, shape index: {}]
  %s4 = sld [smem:[#allocation0]]
  $region34: #{tpu_custom_call.1} parent=0
    _
  %s6 = ssub.s32 1, %s4
  %s7 = scalar_select 0, %s6, %s4
  $region1: #{tpu_custom_call.1} parent=0
    #allocation2 [shape = 'u8[4096]{0}', space=vmem, size = 0x1000, scoped, tag = 'input window, operand 0, single buffered']
    #allocation3 [shape = 's32[1]{0}', space=sflag, size = 0x4, scoped, tag = 'scoped memory for tpu_custom_call.1']
    #allocation4 [shape = 's32[1]{0}', space=sflag, size = 0x4, scoped, tag = 'scoped memory for tpu_custom_call.1']
    #allocation5 [shape = 'u8[98304]{0}', space=vmem, size = 0x18000, scoped, tag = 'input window, operand 1, single buffered']
    #allocation6 [shape = 's32[1]{0}', space=sflag, size = 0x4, scoped, tag = 'scoped memory for tpu_custom_call.1']
    #allocation7 [shape = 'u8[8192]{0}', space=vmem, size = 0x2000, scoped, tag = 'input window, operand 2, single buffered']
    #allocation8 [shape = 'u8[24576]{0}', space=vmem, size = 0x6000, scoped, tag = 'output window, operand 0, single buffered']
    %8 = vsyncpa [#allocation3], 0
    %9 = vsyncpa [#allocation6], 0
    %10 = vsyncpa [#allocation4], 0
    // Predicated region
    $region2: #{tpu_custom_call.1} parent=1 // pred_check
      _
    $region3: #{tpu_custom_call.1} parent=1 // pred_check_branch
      %12 = sbr.rel (0) target = $region5
    $region4: #{tpu_custom_call.1} parent=1 // pred_region
      %s14 = ssub.s32 128, 128
      %15 = vsyncadd [#allocation3], %s14
      %s17 = sshll.u32 [#allocation2], 4
      %s18 = int_to_ptr.vmem [resolvable:$true] %s17
      %20 = dma.hbm_to_vmem [thread:$0]  %s0, 128, %s18, [#allocation3]
    $region5: #{tpu_custom_call.1} parent=1 // pred_fallthru
      _
    // Predicated region
    $region6: #{tpu_custom_call.1} parent=1 // pred_check
      _
    $region7: #{tpu_custom_call.1} parent=1 // pred_check_branch
      %22 = sbr.rel (0) target = $region9
    $region8: #{tpu_custom_call.1} parent=1 // pred_region
      %s24 = ssub.s32 3072, 3072
      %25 = vsyncadd [#allocation6], %s24
      %s26 = sshll.u32 [#allocation5], 4
      %s27 = int_to_ptr.vmem [resolvable:$true] %s26
      %32 = dma.hbm_to_vmem [thread:$0]  %s1, 3072, %s27, [#allocation6], 128, 128, 8
    $region9: #{tpu_custom_call.1} parent=1 // pred_fallthru
      _
    // Predicated region
    $region10: #{tpu_custom_call.1} parent=1 // pred_check
      _
    $region11: #{tpu_custom_call.1} parent=1 // pred_check_branch
      %34 = sbr.rel (0) target = $region13
    $region12: #{tpu_custom_call.1} parent=1 // pred_region
      %s36 = ssub.s32 256, 256
      %37 = vsyncadd [#allocation6], %s36
      %s38 = sshll.u32 [#allocation7], 4
      %s39 = int_to_ptr.vmem [resolvable:$true] %s38
      %44 = dma.hbm_to_vmem [thread:$0]  %s2, 256, %s39, [#allocation6], 128, 128, 8
    $region13: #{tpu_custom_call.1} parent=1 // pred_fallthru
      _
    // Predicated region
    $region14: #{tpu_custom_call.1} parent=1 // pred_check
      _
    $region15: #{tpu_custom_call.1} parent=1 // pred_check_branch
      %46 = sbr.rel (0) target = $region17
    $region16: #{tpu_custom_call.1} parent=1 // pred_region
      %47 = dma.done [#allocation3], 128
    $region17: #{tpu_custom_call.1} parent=1 // pred_fallthru
      _
    // Predicated region
    $region18: #{tpu_custom_call.1} parent=1 // pred_check
      _
    $region19: #{tpu_custom_call.1} parent=1 // pred_check_branch
      %49 = sbr.rel (0) target = $region21
    $region20: #{tpu_custom_call.1} parent=1 // pred_region
      %50 = dma.done [#allocation6], 3072
    $region21: #{tpu_custom_call.1} parent=1 // pred_fallthru
      _
    // Predicated region
    $region22: #{tpu_custom_call.1} parent=1 // pred_check
      _
    $region23: #{tpu_custom_call.1} parent=1 // pred_check_branch
      %52 = sbr.rel (0) target = $region25
    $region24: #{tpu_custom_call.1} parent=1 // pred_region
      %53 = dma.done [#allocation6], 256
    $region25: #{tpu_custom_call.1} parent=1 // pred_fallthru
      _
    %v54 = vlaneseq
    %v55 = vand.u32 %v54, 127
    %vm56 = vcmp.lt.s32.totalorder %v55, 0
    %v57 = vsub.s32 0, %v55
    %v58 = vsel %vm56, %v57, %v55
    %v59 = vshrl.u32 %v58, 5
    %v60 = vand.u32 %v58, 31
    %v61 = vsub.s32 0, %v60
    %v62 = vsel %vm56, %v61, %v60
    %vm63 = vcmp.ne.s32.totalorder %v62, 0
    %vm64 = vcmp.lt.s32.totalorder %v62, 0
    %vm65 = vmand %vm64, %vm63
    %v66 = vadd.s32 %v62, 32
    %v67 = vsel %vm65, %v66, %v62
    %v68 = vld [vmem:[#allocation2] sm:$0xff]
    %70 = vrot.lane.b32.xlu0 %v68, 1
    %v71 = vpop.permute.xlu0 %70
    %vm73 = vcmp.ge.s32.totalorder %v67, 1
    %v74 = vsel %vm73, 1, 0
    %vm75 = vcmp.eq.s32.totalorder %v74, 1
    %v76 = vsel %vm75, %v71, 0.0
    %v77 = vld [vmem:[#allocation5] sm:$0xff]
    %v78 = vld [vmem:[#allocation7] sm:$0xff]
    %80 = vset.pattern.permute.xlu0 0
    %81 = vperm.xlu0 %80, %v78
    %v82 = vpop.permute.xlu0 %81
    %vm84 = vcmask 130048
    %v86 = vsel %vm84, %v77, 0
    %88 = vmatprep.subr.mxu0 0.0
    %89 = vmatpush1.msra.mxu0 0.0
    %90 = vmatprep.subr.mxu0 0.0
    %91 = vmatpush1.msra.mxu0 0.0
    %92 = vmatprep.subr.mxu0 0.0
    %93 = vmatpush1.msra.mxu0 0.0
    %94 = vmatprep.subr.mxu0 0.0
    %95 = vmatpush1.msra.mxu0 0.0
    %96 = vmatprep.subr.mxu0 0.0
    %97 = vmatpush1.msra.mxu0 0.0
    %98 = vmatprep.subr.mxu0 0.0
    %99 = vmatpush1.msra.mxu0 0.0
    %100 = vmatprep.subr.mxu0 0.0
    %101 = vmatpush1.msra.mxu0 0.0
    %102 = vmatprep.subr.mxu0 0.0
    %103 = vmatpush1.msra.mxu0 0.0
    %104 = vmatprep.subr.mxu0 0.0
    %105 = vmatpush1.msra.mxu0 0.0
    %106 = vmatprep.subr.mxu0 0.0
    %107 = vmatpush1.msra.mxu0 0.0
    %108 = vmatprep.subr.mxu0 0.0
    %109 = vmatpush1.msra.mxu0 0.0
    %110 = vmatprep.subr.mxu0 0.0
    %111 = vmatpush1.msra.mxu0 0.0
    %112 = vmatprep.subr.mxu0 0.0
    %113 = vmatpush1.msra.mxu0 0.0
    %114 = vmatprep.subr.mxu0 0.0
    %115 = vmatpush1.msra.mxu0 0.0
    %116 = vmatprep.subr.mxu0 0.0
    %117 = vmatpush1.msra.mxu0 %v68
    %118 = vmatprep.subr.mxu0 0.0
    %119 = vmatpush1.msra.mxu0 %v76
    %120 = vmatprep.subr.mxu0 0.0
    %121 = vmatpush2.msra.mxu0 0.0
    %122 = vmatprep.subr.mxu0 0.0
    %123 = vmatpush2.msra.mxu0 0.0
    %124 = vmatprep.subr.mxu0 0.0
    %125 = vmatpush2.msra.mxu0 0.0
    %126 = vmatprep.subr.mxu0 0.0
    %127 = vmatpush2.msra.mxu0 0.0
    %128 = vmatprep.subr.mxu0 0.0
    %129 = vmatpush2.msra.mxu0 0.0
    %130 = vmatprep.subr.mxu0 0.0
    %131 = vmatpush2.msra.mxu0 0.0
    %132 = vmatprep.subr.mxu0 0.0
    %133 = vmatpush2.msra.mxu0 0.0
    %134 = vmatprep.subr.mxu0 0.0
    %135 = vmatpush2.msra.mxu0 0.0
    %136 = vmatprep.subr.mxu0 0.0
    %137 = vmatpush2.msra.mxu0 0.0
    %138 = vmatprep.subr.mxu0 0.0
    %139 = vmatpush2.msra.mxu0 0.0
    %140 = vmatprep.subr.mxu0 0.0
    %141 = vmatpush2.msra.mxu0 0.0
    %142 = vmatprep.subr.mxu0 0.0
    %143 = vmatpush2.msra.mxu0 0.0
    %144 = vmatprep.subr.mxu0 0.0
    %145 = vmatpush2.msra.mxu0 0.0
    %146 = vmatprep.subr.mxu0 0.0
    %147 = vmatpush2.msra.mxu0 0.0
    %148 = vmatprep.subr.mxu0 0.0
    %149 = vmatpush2.msra.mxu0 0.0
    %150 = vmatprep.subr.mxu0 0.0
    %151 = vmatpush2.msra.mxu0 0.0
    %152 = vmatprep.mubr.f32.mxu0 0.0
    %153 = vmatmul.mubr.f32.gmra.mxu0 %v86
    %v154 = vpop.f32.mrf.mxu0
    %v155 = vadd.f32 %v82, %v154
    %v156 = vpop.f32.mrf.mxu0
    %157 = vdwg.mxu0
    %v158 = vtanh.pop %v155
    %v159 = vxor.u32 %v155, 2147483648
    %v160 = vmul.f32 %v159, 1.442695
    %v161 = vpow.pop %v160
    %v162 = vadd.f32 %v161, 1.0
    %v163 = vrcp.pop %v162
    %v164 = vmul.f32 1.0, %v163
    %v165 = vmul.f32 %v158, %v164
    %s166 = scalar_lea.vmem [#allocation5], 96
    %v167 = vld [vmem:[%s166] sm:$0xff]
    %v168 = vld [vmem:[%s166 + $0x8] sm:$0xff]
    %vm169 = vcmask 64512
    %v171 = vsel %vm169, %v167, 0
    %v174 = vsel %vm169, %v168, 0
    %176 = vmatprep.subr.mxu0 0.0
    %177 = vmatpush1.msra.mxu0 0.0
    %178 = vmatprep.subr.mxu0 0.0
    %179 = vmatpush1.msra.mxu0 0.0
    %180 = vmatprep.subr.mxu0 0.0
    %181 = vmatpush1.msra.mxu0 0.0
    %182 = vmatprep.subr.mxu0 0.0
    %183 = vmatpush1.msra.mxu0 0.0
    %184 = vmatprep.subr.mxu0 0.0
    %185 = vmatpush1.msra.mxu0 0.0
    %186 = vmatprep.subr.mxu0 0.0
    %187 = vmatpush1.msra.mxu0 0.0
    %188 = vmatprep.subr.mxu0 0.0
    %189 = vmatpush1.msra.mxu0 0.0
    %190 = vmatprep.subr.mxu0 0.0
    %191 = vmatpush1.msra.mxu0 0.0
    %192 = vmatprep.subr.mxu0 0.0
    %193 = vmatpush1.msra.mxu0 0.0
    %194 = vmatprep.subr.mxu0 0.0
    %195 = vmatpush1.msra.mxu0 0.0
    %196 = vmatprep.subr.mxu0 0.0
    %197 = vmatpush1.msra.mxu0 0.0
    %198 = vmatprep.subr.mxu0 0.0
    %199 = vmatpush1.msra.mxu0 0.0
    %200 = vmatprep.subr.mxu0 0.0
    %201 = vmatpush1.msra.mxu0 0.0
    %202 = vmatprep.subr.mxu0 0.0
    %203 = vmatpush1.msra.mxu0 0.0
    %204 = vmatprep.subr.mxu0 0.0
    %205 = vmatpush1.msra.mxu0 0.0
    %206 = vmatprep.subr.mxu0 0.0
    %207 = vmatpush1.msra.mxu0 %v165
    %208 = vmatprep.subr.mxu0 0.0
    %209 = vmatpush2.msra.mxu0 0.0
    %210 = vmatprep.subr.mxu0 0.0
    %211 = vmatpush2.msra.mxu0 0.0
    %212 = vmatprep.subr.mxu0 0.0
    %213 = vmatpush2.msra.mxu0 0.0
    %214 = vmatprep.subr.mxu0 0.0
    %215 = vmatpush2.msra.mxu0 0.0
    %216 = vmatprep.subr.mxu0 0.0
    %217 = vmatpush2.msra.mxu0 0.0
    %218 = vmatprep.subr.mxu0 0.0
    %219 = vmatpush2.msra.mxu0 0.0
    %220 = vmatprep.subr.mxu0 0.0
    %221 = vmatpush2.msra.mxu0 0.0
    %222 = vmatprep.subr.mxu0 0.0
    %223 = vmatpush2.msra.mxu0 0.0
    %224 = vmatprep.subr.mxu0 0.0
    %225 = vmatpush2.msra.mxu0 0.0
    %226 = vmatprep.subr.mxu0 0.0
    %227 = vmatpush2.msra.mxu0 0.0
    %228 = vmatprep.subr.mxu0 0.0
    %229 = vmatpush2.msra.mxu0 0.0
    %230 = vmatprep.subr.mxu0 0.0
    %231 = vmatpush2.msra.mxu0 0.0
    %232 = vmatprep.subr.mxu0 0.0
    %233 = vmatpush2.msra.mxu0 0.0
    %234 = vmatprep.subr.mxu0 0.0
    %235 = vmatpush2.msra.mxu0 0.0
    %236 = vmatprep.subr.mxu0 0.0
    %237 = vmatpush2.msra.mxu0 0.0
    %238 = vmatprep.subr.mxu0 0.0
    %239 = vmatpush2.msra.mxu0 0.0
    %240 = vmatprep.mubr.f32.mxu0 0.0
    %241 = vmatmul.mubr.f32.gmra.mxu0 %v171
    %v242 = vpop.f32.mrf.mxu0
    %v243 = vadd.f32 0.0, %v242
    %v244 = vpop.f32.mrf.mxu0
    %245 = vmatprep.mubr.f32.mxu0 0.0
    %246 = vmatmul.mubr.f32.gmra.mxu0 %v174
    %v247 = vpop.f32.mrf.mxu0
    %v248 = vadd.f32 0.0, %v247
    %v249 = vpop.f32.mrf.mxu0
    %250 = vdwg.mxu0
    %251 = vset.pattern.permute.xlu0 6
    %252 = vperm.xlu0 %251, %v78
    %v253 = vpop.permute.xlu0 %252
    %v255 = vadd.f32 %v243, %v253
    %v256 = vadd.f32 %v255, %v68
    %257 = vset.pattern.permute.xlu0 12
    %258 = vperm.xlu0 %257, %v78
    %v259 = vpop.permute.xlu0 %258
    %v261 = vadd.f32 %v248, %v259
    %262 = vst [vmem:[#allocation8] sm:$0xff] %v261
    %264 = vrot.lane.b32.xlu0 %v256, 2
    %v265 = vpop.permute.xlu0 %264
    %vm267 = vcmp.ge.s32.totalorder %v67, 2
    %v268 = vsel %vm267, 1, 0
    %vm269 = vcmp.eq.s32.totalorder %v268, 1
    %v270 = vsel %vm269, %v265, 0.0
    %s271 = scalar_lea.vmem [#allocation5], 16
    %v272 = vld [vmem:[%s271] sm:$0xff]
    %v273 = vld [vmem:[#allocation7] sm:$0xff]
    %275 = vset.pattern.permute.xlu0 1
    %276 = vperm.xlu0 %275, %v273
    %v277 = vpop.permute.xlu0 %276
    %v280 = vsel %vm84, %v272, 0
    %282 = vmatprep.subr.mxu0 0.0
    %283 = vmatpush1.msra.mxu0 0.0
    %284 = vmatprep.subr.mxu0 0.0
    %285 = vmatpush1.msra.mxu0 0.0
    %286 = vmatprep.subr.mxu0 0.0
    %287 = vmatpush1.msra.mxu0 0.0
    %288 = vmatprep.subr.mxu0 0.0
    %289 = vmatpush1.msra.mxu0 0.0
    %290 = vmatprep.subr.mxu0 0.0
    %291 = vmatpush1.msra.mxu0 0.0
    %292 = vmatprep.subr.mxu0 0.0
    %293 = vmatpush1.msra.mxu0 0.0
    %294 = vmatprep.subr.mxu0 0.0
    %295 = vmatpush1.msra.mxu0 0.0
    %296 = vmatprep.subr.mxu0 0.0
    %297 = vmatpush1.msra.mxu0 0.0
    %298 = vmatprep.subr.mxu0 0.0
    %299 = vmatpush1.msra.mxu0 0.0
    %300 = vmatprep.subr.mxu0 0.0
    %301 = vmatpush1.msra.mxu0 0.0
    %302 = vmatprep.subr.mxu0 0.0
    %303 = vmatpush1.msra.mxu0 0.0
    %304 = vmatprep.subr.mxu0 0.0
    %305 = vmatpush1.msra.mxu0 0.0
    %306 = vmatprep.subr.mxu0 0.0
    %307 = vmatpush1.msra.mxu0 0.0
    %308 = vmatprep.subr.mxu0 0.0
    %309 = vmatpush1.msra.mxu0 0.0
    %310 = vmatprep.subr.mxu0 0.0
    %311 = vmatpush1.msra.mxu0 %v256
    %312 = vmatprep.subr.mxu0 0.0
    %313 = vmatpush1.msra.mxu0 %v270
    %314 = vmatprep.subr.mxu0 0.0
    %315 = vmatpush2.msra.mxu0 0.0
    %316 = vmatprep.subr.mxu0 0.0
    %317 = vmatpush2.msra.mxu0 0.0
    %318 = vmatprep.subr.mxu0 0.0
    %319 = vmatpush2.msra.mxu0 0.0
    %320 = vmatprep.subr.mxu0 0.0
    %321 = vmatpush2.msra.mxu0 0.0
    %322 = vmatprep.subr.mxu0 0.0
    %323 = vmatpush2.msra.mxu0 0.0
    %324 = vmatprep.subr.mxu0 0.0
    %325 = vmatpush2.msra.mxu0 0.0
    %326 = vmatprep.subr.mxu0 0.0
    %327 = vmatpush2.msra.mxu0 0.0
    %328 = vmatprep.subr.mxu0 0.0
    %329 = vmatpush2.msra.mxu0 0.0
    %330 = vmatprep.subr.mxu0 0.0
    %331 = vmatpush2.msra.mxu0 0.0
    %332 = vmatprep.subr.mxu0 0.0
    %333 = vmatpush2.msra.mxu0 0.0
    %334 = vmatprep.subr.mxu0 0.0
    %335 = vmatpush2.msra.mxu0 0.0
    %336 = vmatprep.subr.mxu0 0.0
    %337 = vmatpush2.msra.mxu0 0.0
    %338 = vmatprep.subr.mxu0 0.0
    %339 = vmatpush2.msra.mxu0 0.0
    %340 = vmatprep.subr.mxu0 0.0
    %341 = vmatpush2.msra.mxu0 0.0
    %342 = vmatprep.subr.mxu0 0.0
    %343 = vmatpush2.msra.mxu0 0.0
    %344 = vmatprep.subr.mxu0 0.0
    %345 = vmatpush2.msra.mxu0 0.0
    %346 = vmatprep.mubr.f32.mxu0 0.0
    %347 = vmatmul.mubr.f32.gmra.mxu0 %v280
    %v348 = vpop.f32.mrf.mxu0
    %v349 = vadd.f32 %v277, %v348
    %v350 = vpop.f32.mrf.mxu0
    %351 = vdwg.mxu0
    %v352 = vtanh.pop %v349
    %v353 = vxor.u32 %v349, 2147483648
    %v354 = vmul.f32 %v353, 1.442695
    %v355 = vpow.pop %v354
    %v356 = vadd.f32 %v355, 1.0
    %v357 = vrcp.pop %v356
    %v358 = vmul.f32 1.0, %v357
    %v359 = vmul.f32 %v352, %v358
    %s360 = scalar_lea.vmem [#allocation5], 112
    %v361 = vld [vmem:[%s360] sm:$0xff]
    %v362 = vld [vmem:[%s360 + $0x8] sm:$0xff]
    %v364 = vsel %vm169, %v361, 0
    %v367 = vsel %vm169, %v362, 0
    %369 = vmatprep.subr.mxu0 0.0
    %370 = vmatpush1.msra.mxu0 0.0
    %371 = vmatprep.subr.mxu0 0.0
    %372 = vmatpush1.msra.mxu0 0.0
    %373 = vmatprep.subr.mxu0 0.0
    %374 = vmatpush1.msra.mxu0 0.0
    %375 = vmatprep.subr.mxu0 0.0
    %376 = vmatpush1.msra.mxu0 0.0
    %377 = vmatprep.subr.mxu0 0.0
    %378 = vmatpush1.msra.mxu0 0.0
    %379 = vmatprep.subr.mxu0 0.0
    %380 = vmatpush1.msra.mxu0 0.0
    %381 = vmatprep.subr.mxu0 0.0
    %382 = vmatpush1.msra.mxu0 0.0
    %383 = vmatprep.subr.mxu0 0.0
    %384 = vmatpush1.msra.mxu0 0.0
    %385 = vmatprep.subr.mxu0 0.0
    %386 = vmatpush1.msra.mxu0 0.0
    %387 = vmatprep.subr.mxu0 0.0
    %388 = vmatpush1.msra.mxu0 0.0
    %389 = vmatprep.subr.mxu0 0.0
    %390 = vmatpush1.msra.mxu0 0.0
    %391 = vmatprep.subr.mxu0 0.0
    %392 = vmatpush1.msra.mxu0 0.0
    %393 = vmatprep.subr.mxu0 0.0
    %394 = vmatpush1.msra.mxu0 0.0
    %395 = vmatprep.subr.mxu0 0.0
    %396 = vmatpush1.msra.mxu0 0.0
    %397 = vmatprep.subr.mxu0 0.0
    %398 = vmatpush1.msra.mxu0 0.0
    %399 = vmatprep.subr.mxu0 0.0
    %400 = vmatpush1.msra.mxu0 %v359
    %401 = vmatprep.subr.mxu0 0.0
    %402 = vmatpush2.msra.mxu0 0.0
    %403 = vmatprep.subr.mxu0 0.0
    %404 = vmatpush2.msra.mxu0 0.0
    %405 = vmatprep.subr.mxu0 0.0
    %406 = vmatpush2.msra.mxu0 0.0
    %407 = vmatprep.subr.mxu0 0.0
    %408 = vmatpush2.msra.mxu0 0.0
    %409 = vmatprep.subr.mxu0 0.0
    %410 = vmatpush2.msra.mxu0 0.0
    %411 = vmatprep.subr.mxu0 0.0
    %412 = vmatpush2.msra.mxu0 0.0
    %413 = vmatprep.subr.mxu0 0.0
    %414 = vmatpush2.msra.mxu0 0.0
    %415 = vmatprep.subr.mxu0 0.0
    %416 = vmatpush2.msra.mxu0 0.0
    %417 = vmatprep.subr.mxu0 0.0
    %418 = vmatpush2.msra.mxu0 0.0
    %419 = vmatprep.subr.mxu0 0.0
    %420 = vmatpush2.msra.mxu0 0.0
    %421 = vmatprep.subr.mxu0 0.0
    %422 = vmatpush2.msra.mxu0 0.0
    %423 = vmatprep.subr.mxu0 0.0
    %424 = vmatpush2.msra.mxu0 0.0
    %425 = vmatprep.subr.mxu0 0.0
    %426 = vmatpush2.msra.mxu0 0.0
    %427 = vmatprep.subr.mxu0 0.0
    %428 = vmatpush2.msra.mxu0 0.0
    %429 = vmatprep.subr.mxu0 0.0
    %430 = vmatpush2.msra.mxu0 0.0
    %431 = vmatprep.subr.mxu0 0.0
    %432 = vmatpush2.msra.mxu0 0.0
    %433 = vmatprep.mubr.f32.mxu0 0.0
    %434 = vmatmul.mubr.f32.gmra.mxu0 %v364
    %v435 = vpop.f32.mrf.mxu0
    %v436 = vadd.f32 0.0, %v435
    %v437 = vpop.f32.mrf.mxu0
    %438 = vmatprep.mubr.f32.mxu0 0.0
    %439 = vmatmul.mubr.f32.gmra.mxu0 %v367
    %v440 = vpop.f32.mrf.mxu0
    %v441 = vadd.f32 0.0, %v440
    %v442 = vpop.f32.mrf.mxu0
    %443 = vdwg.mxu0
    %444 = vset.pattern.permute.xlu0 7
    %445 = vperm.xlu0 %444, %v273
    %v446 = vpop.permute.xlu0 %445
    %v448 = vadd.f32 %v436, %v446
    %v449 = vadd.f32 %v448, %v256
    %450 = vset.pattern.permute.xlu0 13
    %451 = vperm.xlu0 %450, %v273
    %v452 = vpop.permute.xlu0 %451
    %v454 = vadd.f32 %v441, %v452
    %s455 = scalar_lea.vmem [#allocation8], 8
    %456 = vst [vmem:[%s455] sm:$0xff] %v454
    %458 = vrot.lane.b32.xlu0 %v449, 4
    %v459 = vpop.permute.xlu0 %458
    %vm461 = vcmp.ge.s32.totalorder %v67, 4
    %v462 = vsel %vm461, 1, 0
    %vm463 = vcmp.eq.s32.totalorder %v462, 1
    %v464 = vsel %vm463, %v459, 0.0
    %s465 = scalar_lea.vmem [#allocation5], 32
    %v466 = vld [vmem:[%s465] sm:$0xff]
    %v467 = vld [vmem:[#allocation7] sm:$0xff]
    %469 = vset.pattern.permute.xlu0 2
    %470 = vperm.xlu0 %469, %v467
    %v471 = vpop.permute.xlu0 %470
    %v474 = vsel %vm84, %v466, 0
    %476 = vmatprep.subr.mxu0 0.0
    %477 = vmatpush1.msra.mxu0 0.0
    %478 = vmatprep.subr.mxu0 0.0
    %479 = vmatpush1.msra.mxu0 0.0
    %480 = vmatprep.subr.mxu0 0.0
    %481 = vmatpush1.msra.mxu0 0.0
    %482 = vmatprep.subr.mxu0 0.0
    %483 = vmatpush1.msra.mxu0 0.0
    %484 = vmatprep.subr.mxu0 0.0
    %485 = vmatpush1.msra.mxu0 0.0
    %486 = vmatprep.subr.mxu0 0.0
    %487 = vmatpush1.msra.mxu0 0.0
    %488 = vmatprep.subr.mxu0 0.0
    %489 = vmatpush1.msra.mxu0 0.0
    %490 = vmatprep.subr.mxu0 0.0
    %491 = vmatpush1.msra.mxu0 0.0
    %492 = vmatprep.subr.mxu0 0.0
    %493 = vmatpush1.msra.mxu0 0.0
    %494 = vmatprep.subr.mxu0 0.0
    %495 = vmatpush1.msra.mxu0 0.0
    %496 = vmatprep.subr.mxu0 0.0
    %497 = vmatpush1.msra.mxu0 0.0
    %498 = vmatprep.subr.mxu0 0.0
    %499 = vmatpush1.msra.mxu0 0.0
    %500 = vmatprep.subr.mxu0 0.0
    %501 = vmatpush1.msra.mxu0 0.0
    %502 = vmatprep.subr.mxu0 0.0
    %503 = vmatpush1.msra.mxu0 0.0
    %504 = vmatprep.subr.mxu0 0.0
    %505 = vmatpush1.msra.mxu0 %v449
    %506 = vmatprep.subr.mxu0 0.0
    %507 = vmatpush1.msra.mxu0 %v464
    %508 = vmatprep.subr.mxu0 0.0
    %509 = vmatpush2.msra.mxu0 0.0
    %510 = vmatprep.subr.mxu0 0.0
    %511 = vmatpush2.msra.mxu0 0.0
    %512 = vmatprep.subr.mxu0 0.0
    %513 = vmatpush2.msra.mxu0 0.0
    %514 = vmatprep.subr.mxu0 0.0
    %515 = vmatpush2.msra.mxu0 0.0
    %516 = vmatprep.subr.mxu0 0.0
    %517 = vmatpush2.msra.mxu0 0.0
    %518 = vmatprep.subr.mxu0 0.0
    %519 = vmatpush2.msra.mxu0 0.0
    %520 = vmatprep.subr.mxu0 0.0
    %521 = vmatpush2.msra.mxu0 0.0
    %522 = vmatprep.subr.mxu0 0.0
    %523 = vmatpush2.msra.mxu0 0.0
    %524 = vmatprep.subr.mxu0 0.0
    %525 = vmatpush2.msra.mxu0 0.0
    %526 = vmatprep.subr.mxu0 0.0
    %527 = vmatpush2.msra.mxu0 0.0
    %528 = vmatprep.subr.mxu0 0.0
    %529 = vmatpush2.msra.mxu0 0.0
    %530 = vmatprep.subr.mxu0 0.0
    %531 = vmatpush2.msra.mxu0 0.0
    %532 = vmatprep.subr.mxu0 0.0
    %533 = vmatpush2.msra.mxu0 0.0
    %534 = vmatprep.subr.mxu0 0.0
    %535 = vmatpush2.msra.mxu0 0.0
    %536 = vmatprep.subr.mxu0 0.0
    %537 = vmatpush2.msra.mxu0 0.0
    %538 = vmatprep.subr.mxu0 0.0
    %539 = vmatpush2.msra.mxu0 0.0
    %540 = vmatprep.mubr.f32.mxu0 0.0
    %541 = vmatmul.mubr.f32.gmra.mxu0 %v474
    %v542 = vpop.f32.mrf.mxu0
    %v543 = vadd.f32 %v471, %v542
    %v544 = vpop.f32.mrf.mxu0
    %545 = vdwg.mxu0
    %v546 = vtanh.pop %v543
    %v547 = vxor.u32 %v543, 2147483648
    %v548 = vmul.f32 %v547, 1.442695
    %v549 = vpow.pop %v548
    %v550 = vadd.f32 %v549, 1.0
    %v551 = vrcp.pop %v550
    %v552 = vmul.f32 1.0, %v551
    %v553 = vmul.f32 %v546, %v552
    %s554 = scalar_lea.vmem [#allocation5], 128
    %v555 = vld [vmem:[%s554] sm:$0xff]
    %v556 = vld [vmem:[%s554 + $0x8] sm:$0xff]
    %v558 = vsel %vm169, %v555, 0
    %v561 = vsel %vm169, %v556, 0
    %563 = vmatprep.subr.mxu0 0.0
    %564 = vmatpush1.msra.mxu0 0.0
    %565 = vmatprep.subr.mxu0 0.0
    %566 = vmatpush1.msra.mxu0 0.0
    %567 = vmatprep.subr.mxu0 0.0
    %568 = vmatpush1.msra.mxu0 0.0
    %569 = vmatprep.subr.mxu0 0.0
    %570 = vmatpush1.msra.mxu0 0.0
    %571 = vmatprep.subr.mxu0 0.0
    %572 = vmatpush1.msra.mxu0 0.0
    %573 = vmatprep.subr.mxu0 0.0
    %574 = vmatpush1.msra.mxu0 0.0
    %575 = vmatprep.subr.mxu0 0.0
    %576 = vmatpush1.msra.mxu0 0.0
    %577 = vmatprep.subr.mxu0 0.0
    %578 = vmatpush1.msra.mxu0 0.0
    %579 = vmatprep.subr.mxu0 0.0
    %580 = vmatpush1.msra.mxu0 0.0
    %581 = vmatprep.subr.mxu0 0.0
    %582 = vmatpush1.msra.mxu0 0.0
    %583 = vmatprep.subr.mxu0 0.0
    %584 = vmatpush1.msra.mxu0 0.0
    %585 = vmatprep.subr.mxu0 0.0
    %586 = vmatpush1.msra.mxu0 0.0
    %587 = vmatprep.subr.mxu0 0.0
    %588 = vmatpush1.msra.mxu0 0.0
    %589 = vmatprep.subr.mxu0 0.0
    %590 = vmatpush1.msra.mxu0 0.0
    %591 = vmatprep.subr.mxu0 0.0
    %592 = vmatpush1.msra.mxu0 0.0
    %593 = vmatprep.subr.mxu0 0.0
    %594 = vmatpush1.msra.mxu0 %v553
    %595 = vmatprep.subr.mxu0 0.0
    %596 = vmatpush2.msra.mxu0 0.0
    %597 = vmatprep.subr.mxu0 0.0
    %598 = vmatpush2.msra.mxu0 0.0
    %599 = vmatprep.subr.mxu0 0.0
    %600 = vmatpush2.msra.mxu0 0.0
    %601 = vmatprep.subr.mxu0 0.0
    %602 = vmatpush2.msra.mxu0 0.0
    %603 = vmatprep.subr.mxu0 0.0
    %604 = vmatpush2.msra.mxu0 0.0
    %605 = vmatprep.subr.mxu0 0.0
    %606 = vmatpush2.msra.mxu0 0.0
    %607 = vmatprep.subr.mxu0 0.0
    %608 = vmatpush2.msra.mxu0 0.0
    %609 = vmatprep.subr.mxu0 0.0
    %610 = vmatpush2.msra.mxu0 0.0
    %611 = vmatprep.subr.mxu0 0.0
    %612 = vmatpush2.msra.mxu0 0.0
    %613 = vmatprep.subr.mxu0 0.0
    %614 = vmatpush2.msra.mxu0 0.0
    %615 = vmatprep.subr.mxu0 0.0
    %616 = vmatpush2.msra.mxu0 0.0
    %617 = vmatprep.subr.mxu0 0.0
    %618 = vmatpush2.msra.mxu0 0.0
    %619 = vmatprep.subr.mxu0 0.0
    %620 = vmatpush2.msra.mxu0 0.0
    %621 = vmatprep.subr.mxu0 0.0
    %622 = vmatpush2.msra.mxu0 0.0
    %623 = vmatprep.subr.mxu0 0.0
    %624 = vmatpush2.msra.mxu0 0.0
    %625 = vmatprep.subr.mxu0 0.0
    %626 = vmatpush2.msra.mxu0 0.0
    %627 = vmatprep.mubr.f32.mxu0 0.0
    %628 = vmatmul.mubr.f32.gmra.mxu0 %v558
    %v629 = vpop.f32.mrf.mxu0
    %v630 = vadd.f32 0.0, %v629
    %v631 = vpop.f32.mrf.mxu0
    %632 = vmatprep.mubr.f32.mxu0 0.0
    %633 = vmatmul.mubr.f32.gmra.mxu0 %v561
    %v634 = vpop.f32.mrf.mxu0
    %v635 = vadd.f32 0.0, %v634
    %v636 = vpop.f32.mrf.mxu0
    %637 = vdwg.mxu0
    %638 = vset.pattern.permute.xlu0 8
    %639 = vperm.xlu0 %638, %v467
    %v640 = vpop.permute.xlu0 %639
    %v642 = vadd.f32 %v630, %v640
    %v643 = vadd.f32 %v642, %v449
    %644 = vset.pattern.permute.xlu0 14
    %645 = vperm.xlu0 %644, %v467
    %v646 = vpop.permute.xlu0 %645
    %v648 = vadd.f32 %v635, %v646
    %s649 = scalar_lea.vmem [#allocation8], 16
    %650 = vst [vmem:[%s649] sm:$0xff] %v648
    %652 = vrot.lane.b32.xlu0 %v643, 1
    %v653 = vpop.permute.xlu0 %652
    %v655 = vsel %vm75, %v653, 0.0
    %s656 = scalar_lea.vmem [#allocation5], 48
    %v657 = vld [vmem:[%s656] sm:$0xff]
    %v658 = vld [vmem:[#allocation7] sm:$0xff]
    %660 = vset.pattern.permute.xlu0 3
    %661 = vperm.xlu0 %660, %v658
    %v662 = vpop.permute.xlu0 %661
    %v665 = vsel %vm84, %v657, 0
    %667 = vmatprep.subr.mxu0 0.0
    %668 = vmatpush1.msra.mxu0 0.0
    %669 = vmatprep.subr.mxu0 0.0
    %670 = vmatpush1.msra.mxu0 0.0
    %671 = vmatprep.subr.mxu0 0.0
    %672 = vmatpush1.msra.mxu0 0.0
    %673 = vmatprep.subr.mxu0 0.0
    %674 = vmatpush1.msra.mxu0 0.0
    %675 = vmatprep.subr.mxu0 0.0
    %676 = vmatpush1.msra.mxu0 0.0
    %677 = vmatprep.subr.mxu0 0.0
    %678 = vmatpush1.msra.mxu0 0.0
    %679 = vmatprep.subr.mxu0 0.0
    %680 = vmatpush1.msra.mxu0 0.0
    %681 = vmatprep.subr.mxu0 0.0
    %682 = vmatpush1.msra.mxu0 0.0
    %683 = vmatprep.subr.mxu0 0.0
    %684 = vmatpush1.msra.mxu0 0.0
    %685 = vmatprep.subr.mxu0 0.0
    %686 = vmatpush1.msra.mxu0 0.0
    %687 = vmatprep.subr.mxu0 0.0
    %688 = vmatpush1.msra.mxu0 0.0
    %689 = vmatprep.subr.mxu0 0.0
    %690 = vmatpush1.msra.mxu0 0.0
    %691 = vmatprep.subr.mxu0 0.0
    %692 = vmatpush1.msra.mxu0 0.0
    %693 = vmatprep.subr.mxu0 0.0
    %694 = vmatpush1.msra.mxu0 0.0
    %695 = vmatprep.subr.mxu0 0.0
    %696 = vmatpush1.msra.mxu0 %v643
    %697 = vmatprep.subr.mxu0 0.0
    %698 = vmatpush1.msra.mxu0 %v655
    %699 = vmatprep.subr.mxu0 0.0
    %700 = vmatpush2.msra.mxu0 0.0
    %701 = vmatprep.subr.mxu0 0.0
    %702 = vmatpush2.msra.mxu0 0.0
    %703 = vmatprep.subr.mxu0 0.0
    %704 = vmatpush2.msra.mxu0 0.0
    %705 = vmatprep.subr.mxu0 0.0
    %706 = vmatpush2.msra.mxu0 0.0
    %707 = vmatprep.subr.mxu0 0.0
    %708 = vmatpush2.msra.mxu0 0.0
    %709 = vmatprep.subr.mxu0 0.0
    %710 = vmatpush2.msra.mxu0 0.0
    %711 = vmatprep.subr.mxu0 0.0
    %712 = vmatpush2.msra.mxu0 0.0
    %713 = vmatprep.subr.mxu0 0.0
    %714 = vmatpush2.msra.mxu0 0.0
    %715 = vmatprep.subr.mxu0 0.0
    %716 = vmatpush2.msra.mxu0 0.0
    %717 = vmatprep.subr.mxu0 0.0
    %718 = vmatpush2.msra.mxu0 0.0
    %719 = vmatprep.subr.mxu0 0.0
    %720 = vmatpush2.msra.mxu0 0.0
    %721 = vmatprep.subr.mxu0 0.0
    %722 = vmatpush2.msra.mxu0 0.0
    %723 = vmatprep.subr.mxu0 0.0
    %724 = vmatpush2.msra.mxu0 0.0
    %725 = vmatprep.subr.mxu0 0.0
    %726 = vmatpush2.msra.mxu0 0.0
    %727 = vmatprep.subr.mxu0 0.0
    %728 = vmatpush2.msra.mxu0 0.0
    %729 = vmatprep.subr.mxu0 0.0
    %730 = vmatpush2.msra.mxu0 0.0
    %731 = vmatprep.mubr.f32.mxu0 0.0
    %732 = vmatmul.mubr.f32.gmra.mxu0 %v665
    %v733 = vpop.f32.mrf.mxu0
    %v734 = vadd.f32 %v662, %v733
    %v735 = vpop.f32.mrf.mxu0
    %736 = vdwg.mxu0
    %v737 = vtanh.pop %v734
    %v738 = vxor.u32 %v734, 2147483648
    %v739 = vmul.f32 %v738, 1.442695
    %v740 = vpow.pop %v739
    %v741 = vadd.f32 %v740, 1.0
    %v742 = vrcp.pop %v741
    %v743 = vmul.f32 1.0, %v742
    %v744 = vmul.f32 %v737, %v743
    %s745 = scalar_lea.vmem [#allocation5], 144
    %v746 = vld [vmem:[%s745] sm:$0xff]
    %v747 = vld [vmem:[%s745 + $0x8] sm:$0xff]
    %v749 = vsel %vm169, %v746, 0
    %v752 = vsel %vm169, %v747, 0
    %754 = vmatprep.subr.mxu0 0.0
    %755 = vmatpush1.msra.mxu0 0.0
    %756 = vmatprep.subr.mxu0 0.0
    %757 = vmatpush1.msra.mxu0 0.0
    %758 = vmatprep.subr.mxu0 0.0
    %759 = vmatpush1.msra.mxu0 0.0
    %760 = vmatprep.subr.mxu0 0.0
    %761 = vmatpush1.msra.mxu0 0.0
    %762 = vmatprep.subr.mxu0 0.0
    %763 = vmatpush1.msra.mxu0 0.0
    %764 = vmatprep.subr.mxu0 0.0
    %765 = vmatpush1.msra.mxu0 0.0
    %766 = vmatprep.subr.mxu0 0.0
    %767 = vmatpush1.msra.mxu0 0.0
    %768 = vmatprep.subr.mxu0 0.0
    %769 = vmatpush1.msra.mxu0 0.0
    %770 = vmatprep.subr.mxu0 0.0
    %771 = vmatpush1.msra.mxu0 0.0
    %772 = vmatprep.subr.mxu0 0.0
    %773 = vmatpush1.msra.mxu0 0.0
    %774 = vmatprep.subr.mxu0 0.0
    %775 = vmatpush1.msra.mxu0 0.0
    %776 = vmatprep.subr.mxu0 0.0
    %777 = vmatpush1.msra.mxu0 0.0
    %778 = vmatprep.subr.mxu0 0.0
    %779 = vmatpush1.msra.mxu0 0.0
    %780 = vmatprep.subr.mxu0 0.0
    %781 = vmatpush1.msra.mxu0 0.0
    %782 = vmatprep.subr.mxu0 0.0
    %783 = vmatpush1.msra.mxu0 0.0
    %784 = vmatprep.subr.mxu0 0.0
    %785 = vmatpush1.msra.mxu0 %v744
    %786 = vmatprep.subr.mxu0 0.0
    %787 = vmatpush2.msra.mxu0 0.0
    %788 = vmatprep.subr.mxu0 0.0
    %789 = vmatpush2.msra.mxu0 0.0
    %790 = vmatprep.subr.mxu0 0.0
    %791 = vmatpush2.msra.mxu0 0.0
    %792 = vmatprep.subr.mxu0 0.0
    %793 = vmatpush2.msra.mxu0 0.0
    %794 = vmatprep.subr.mxu0 0.0
    %795 = vmatpush2.msra.mxu0 0.0
    %796 = vmatprep.subr.mxu0 0.0
    %797 = vmatpush2.msra.mxu0 0.0
    %798 = vmatprep.subr.mxu0 0.0
    %799 = vmatpush2.msra.mxu0 0.0
    %800 = vmatprep.subr.mxu0 0.0
    %801 = vmatpush2.msra.mxu0 0.0
    %802 = vmatprep.subr.mxu0 0.0
    %803 = vmatpush2.msra.mxu0 0.0
    %804 = vmatprep.subr.mxu0 0.0
    %805 = vmatpush2.msra.mxu0 0.0
    %806 = vmatprep.subr.mxu0 0.0
    %807 = vmatpush2.msra.mxu0 0.0
    %808 = vmatprep.subr.mxu0 0.0
    %809 = vmatpush2.msra.mxu0 0.0
    %810 = vmatprep.subr.mxu0 0.0
    %811 = vmatpush2.msra.mxu0 0.0
    %812 = vmatprep.subr.mxu0 0.0
    %813 = vmatpush2.msra.mxu0 0.0
    %814 = vmatprep.subr.mxu0 0.0
    %815 = vmatpush2.msra.mxu0 0.0
    %816 = vmatprep.subr.mxu0 0.0
    %817 = vmatpush2.msra.mxu0 0.0
    %818 = vmatprep.mubr.f32.mxu0 0.0
    %819 = vmatmul.mubr.f32.gmra.mxu0 %v749
    %v820 = vpop.f32.mrf.mxu0
    %v821 = vadd.f32 0.0, %v820
    %v822 = vpop.f32.mrf.mxu0
    %823 = vmatprep.mubr.f32.mxu0 0.0
    %824 = vmatmul.mubr.f32.gmra.mxu0 %v752
    %v825 = vpop.f32.mrf.mxu0
    %v826 = vadd.f32 0.0, %v825
    %v827 = vpop.f32.mrf.mxu0
    %828 = vdwg.mxu0
    %829 = vset.pattern.permute.xlu0 9
    %830 = vperm.xlu0 %829, %v658
    %v831 = vpop.permute.xlu0 %830
    %v833 = vadd.f32 %v821, %v831
    %v834 = vadd.f32 %v833, %v643
    %835 = vset.pattern.permute.xlu0 15
    %836 = vperm.xlu0 %835, %v658
    %v837 = vpop.permute.xlu0 %836
    %v839 = vadd.f32 %v826, %v837
    %s840 = scalar_lea.vmem [#allocation8], 24
    %841 = vst [vmem:[%s840] sm:$0xff] %v839
    %843 = vrot.lane.b32.xlu0 %v834, 2
    %v844 = vpop.permute.xlu0 %843
    %v846 = vsel %vm269, %v844, 0.0
    %s847 = scalar_lea.vmem [#allocation5], 64
    %v848 = vld [vmem:[%s847] sm:$0xff]
    %v849 = vld [vmem:[#allocation7] sm:$0xff]
    %851 = vset.pattern.permute.xlu0 4
    %852 = vperm.xlu0 %851, %v849
    %v853 = vpop.permute.xlu0 %852
    %v856 = vsel %vm84, %v848, 0
    %858 = vmatprep.subr.mxu0 0.0
    %859 = vmatpush1.msra.mxu0 0.0
    %860 = vmatprep.subr.mxu0 0.0
    %861 = vmatpush1.msra.mxu0 0.0
    %862 = vmatprep.subr.mxu0 0.0
    %863 = vmatpush1.msra.mxu0 0.0
    %864 = vmatprep.subr.mxu0 0.0
    %865 = vmatpush1.msra.mxu0 0.0
    %866 = vmatprep.subr.mxu0 0.0
    %867 = vmatpush1.msra.mxu0 0.0
    %868 = vmatprep.subr.mxu0 0.0
    %869 = vmatpush1.msra.mxu0 0.0
    %870 = vmatprep.subr.mxu0 0.0
    %871 = vmatpush1.msra.mxu0 0.0
    %872 = vmatprep.subr.mxu0 0.0
    %873 = vmatpush1.msra.mxu0 0.0
    %874 = vmatprep.subr.mxu0 0.0
    %875 = vmatpush1.msra.mxu0 0.0
    %876 = vmatprep.subr.mxu0 0.0
    %877 = vmatpush1.msra.mxu0 0.0
    %878 = vmatprep.subr.mxu0 0.0
    %879 = vmatpush1.msra.mxu0 0.0
    %880 = vmatprep.subr.mxu0 0.0
    %881 = vmatpush1.msra.mxu0 0.0
    %882 = vmatprep.subr.mxu0 0.0
    %883 = vmatpush1.msra.mxu0 0.0
    %884 = vmatprep.subr.mxu0 0.0
    %885 = vmatpush1.msra.mxu0 0.0
    %886 = vmatprep.subr.mxu0 0.0
    %887 = vmatpush1.msra.mxu0 %v834
    %888 = vmatprep.subr.mxu0 0.0
    %889 = vmatpush1.msra.mxu0 %v846
    %890 = vmatprep.subr.mxu0 0.0
    %891 = vmatpush2.msra.mxu0 0.0
    %892 = vmatprep.subr.mxu0 0.0
    %893 = vmatpush2.msra.mxu0 0.0
    %894 = vmatprep.subr.mxu0 0.0
    %895 = vmatpush2.msra.mxu0 0.0
    %896 = vmatprep.subr.mxu0 0.0
    %897 = vmatpush2.msra.mxu0 0.0
    %898 = vmatprep.subr.mxu0 0.0
    %899 = vmatpush2.msra.mxu0 0.0
    %900 = vmatprep.subr.mxu0 0.0
    %901 = vmatpush2.msra.mxu0 0.0
    %902 = vmatprep.subr.mxu0 0.0
    %903 = vmatpush2.msra.mxu0 0.0
    %904 = vmatprep.subr.mxu0 0.0
    %905 = vmatpush2.msra.mxu0 0.0
    %906 = vmatprep.subr.mxu0 0.0
    %907 = vmatpush2.msra.mxu0 0.0
    %908 = vmatprep.subr.mxu0 0.0
    %909 = vmatpush2.msra.mxu0 0.0
    %910 = vmatprep.subr.mxu0 0.0
    %911 = vmatpush2.msra.mxu0 0.0
    %912 = vmatprep.subr.mxu0 0.0
    %913 = vmatpush2.msra.mxu0 0.0
    %914 = vmatprep.subr.mxu0 0.0
    %915 = vmatpush2.msra.mxu0 0.0
    %916 = vmatprep.subr.mxu0 0.0
    %917 = vmatpush2.msra.mxu0 0.0
    %918 = vmatprep.subr.mxu0 0.0
    %919 = vmatpush2.msra.mxu0 0.0
    %920 = vmatprep.subr.mxu0 0.0
    %921 = vmatpush2.msra.mxu0 0.0
    %922 = vmatprep.mubr.f32.mxu0 0.0
    %923 = vmatmul.mubr.f32.gmra.mxu0 %v856
    %v924 = vpop.f32.mrf.mxu0
    %v925 = vadd.f32 %v853, %v924
    %v926 = vpop.f32.mrf.mxu0
    %927 = vdwg.mxu0
    %v928 = vtanh.pop %v925
    %v929 = vxor.u32 %v925, 2147483648
    %v930 = vmul.f32 %v929, 1.442695
    %v931 = vpow.pop %v930
    %v932 = vadd.f32 %v931, 1.0
    %v933 = vrcp.pop %v932
    %v934 = vmul.f32 1.0, %v933
    %v935 = vmul.f32 %v928, %v934
    %s936 = scalar_lea.vmem [#allocation5], 160
    %v937 = vld [vmem:[%s936] sm:$0xff]
    %v938 = vld [vmem:[%s936 + $0x8] sm:$0xff]
    %v940 = vsel %vm169, %v937, 0
    %v943 = vsel %vm169, %v938, 0
    %945 = vmatprep.subr.mxu0 0.0
    %946 = vmatpush1.msra.mxu0 0.0
    %947 = vmatprep.subr.mxu0 0.0
    %948 = vmatpush1.msra.mxu0 0.0
    %949 = vmatprep.subr.mxu0 0.0
    %950 = vmatpush1.msra.mxu0 0.0
    %951 = vmatprep.subr.mxu0 0.0
    %952 = vmatpush1.msra.mxu0 0.0
    %953 = vmatprep.subr.mxu0 0.0
    %954 = vmatpush1.msra.mxu0 0.0
    %955 = vmatprep.subr.mxu0 0.0
    %956 = vmatpush1.msra.mxu0 0.0
    %957 = vmatprep.subr.mxu0 0.0
    %958 = vmatpush1.msra.mxu0 0.0
    %959 = vmatprep.subr.mxu0 0.0
    %960 = vmatpush1.msra.mxu0 0.0
    %961 = vmatprep.subr.mxu0 0.0
    %962 = vmatpush1.msra.mxu0 0.0
    %963 = vmatprep.subr.mxu0 0.0
    %964 = vmatpush1.msra.mxu0 0.0
    %965 = vmatprep.subr.mxu0 0.0
    %966 = vmatpush1.msra.mxu0 0.0
    %967 = vmatprep.subr.mxu0 0.0
    %968 = vmatpush1.msra.mxu0 0.0
    %969 = vmatprep.subr.mxu0 0.0
    %970 = vmatpush1.msra.mxu0 0.0
    %971 = vmatprep.subr.mxu0 0.0
    %972 = vmatpush1.msra.mxu0 0.0
    %973 = vmatprep.subr.mxu0 0.0
    %974 = vmatpush1.msra.mxu0 0.0
    %975 = vmatprep.subr.mxu0 0.0
    %976 = vmatpush1.msra.mxu0 %v935
    %977 = vmatprep.subr.mxu0 0.0
    %978 = vmatpush2.msra.mxu0 0.0
    %979 = vmatprep.subr.mxu0 0.0
    %980 = vmatpush2.msra.mxu0 0.0
    %981 = vmatprep.subr.mxu0 0.0
    %982 = vmatpush2.msra.mxu0 0.0
    %983 = vmatprep.subr.mxu0 0.0
    %984 = vmatpush2.msra.mxu0 0.0
    %985 = vmatprep.subr.mxu0 0.0
    %986 = vmatpush2.msra.mxu0 0.0
    %987 = vmatprep.subr.mxu0 0.0
    %988 = vmatpush2.msra.mxu0 0.0
    %989 = vmatprep.subr.mxu0 0.0
    %990 = vmatpush2.msra.mxu0 0.0
    %991 = vmatprep.subr.mxu0 0.0
    %992 = vmatpush2.msra.mxu0 0.0
    %993 = vmatprep.subr.mxu0 0.0
    %994 = vmatpush2.msra.mxu0 0.0
    %995 = vmatprep.subr.mxu0 0.0
    %996 = vmatpush2.msra.mxu0 0.0
    %997 = vmatprep.subr.mxu0 0.0
    %998 = vmatpush2.msra.mxu0 0.0
    %999 = vmatprep.subr.mxu0 0.0
    %1000 = vmatpush2.msra.mxu0 0.0
    %1001 = vmatprep.subr.mxu0 0.0
    %1002 = vmatpush2.msra.mxu0 0.0
    %1003 = vmatprep.subr.mxu0 0.0
    %1004 = vmatpush2.msra.mxu0 0.0
    %1005 = vmatprep.subr.mxu0 0.0
    %1006 = vmatpush2.msra.mxu0 0.0
    %1007 = vmatprep.subr.mxu0 0.0
    %1008 = vmatpush2.msra.mxu0 0.0
    %1009 = vmatprep.mubr.f32.mxu0 0.0
    %1010 = vmatmul.mubr.f32.gmra.mxu0 %v940
    %v1011 = vpop.f32.mrf.mxu0
    %v1012 = vadd.f32 0.0, %v1011
    %v1013 = vpop.f32.mrf.mxu0
    %1014 = vmatprep.mubr.f32.mxu0 0.0
    %1015 = vmatmul.mubr.f32.gmra.mxu0 %v943
    %v1016 = vpop.f32.mrf.mxu0
    %v1017 = vadd.f32 0.0, %v1016
    %v1018 = vpop.f32.mrf.mxu0
    %1019 = vdwg.mxu0
    %1020 = vset.pattern.permute.xlu0 10
    %1021 = vperm.xlu0 %1020, %v849
    %v1022 = vpop.permute.xlu0 %1021
    %v1024 = vadd.f32 %v1012, %v1022
    %v1025 = vadd.f32 %v1024, %v834
    %1026 = vset.pattern.permute.xlu0 16
    %1027 = vperm.xlu0 %1026, %v849
    %v1028 = vpop.permute.xlu0 %1027
    %v1030 = vadd.f32 %v1017, %v1028
    %s1031 = scalar_lea.vmem [#allocation8], 32
    %1032 = vst [vmem:[%s1031] sm:$0xff] %v1030
    %1034 = vrot.lane.b32.xlu0 %v1025, 4
    %v1035 = vpop.permute.xlu0 %1034
    %v1037 = vsel %vm463, %v1035, 0.0
    %s1038 = scalar_lea.vmem [#allocation5], 80
    %v1039 = vld [vmem:[%s1038] sm:$0xff]
    %v1040 = vld [vmem:[#allocation7] sm:$0xff]
    %1042 = vset.pattern.permute.xlu0 5
    %1043 = vperm.xlu0 %1042, %v1040
    %v1044 = vpop.permute.xlu0 %1043
    %v1047 = vsel %vm84, %v1039, 0
    %1049 = vmatprep.subr.mxu0 0.0
    %1050 = vmatpush1.msra.mxu0 0.0
    %1051 = vmatprep.subr.mxu0 0.0
    %1052 = vmatpush1.msra.mxu0 0.0
    %1053 = vmatprep.subr.mxu0 0.0
    %1054 = vmatpush1.msra.mxu0 0.0
    %1055 = vmatprep.subr.mxu0 0.0
    %1056 = vmatpush1.msra.mxu0 0.0
    %1057 = vmatprep.subr.mxu0 0.0
    %1058 = vmatpush1.msra.mxu0 0.0
    %1059 = vmatprep.subr.mxu0 0.0
    %1060 = vmatpush1.msra.mxu0 0.0
    %1061 = vmatprep.subr.mxu0 0.0
    %1062 = vmatpush1.msra.mxu0 0.0
    %1063 = vmatprep.subr.mxu0 0.0
    %1064 = vmatpush1.msra.mxu0 0.0
    %1065 = vmatprep.subr.mxu0 0.0
    %1066 = vmatpush1.msra.mxu0 0.0
    %1067 = vmatprep.subr.mxu0 0.0
    %1068 = vmatpush1.msra.mxu0 0.0
    %1069 = vmatprep.subr.mxu0 0.0
    %1070 = vmatpush1.msra.mxu0 0.0
    %1071 = vmatprep.subr.mxu0 0.0
    %1072 = vmatpush1.msra.mxu0 0.0
    %1073 = vmatprep.subr.mxu0 0.0
    %1074 = vmatpush1.msra.mxu0 0.0
    %1075 = vmatprep.subr.mxu0 0.0
    %1076 = vmatpush1.msra.mxu0 0.0
    %1077 = vmatprep.subr.mxu0 0.0
    %1078 = vmatpush1.msra.mxu0 %v1025
    %1079 = vmatprep.subr.mxu0 0.0
    %1080 = vmatpush1.msra.mxu0 %v1037
    %1081 = vmatprep.subr.mxu0 0.0
    %1082 = vmatpush2.msra.mxu0 0.0
    %1083 = vmatprep.subr.mxu0 0.0
    %1084 = vmatpush2.msra.mxu0 0.0
    %1085 = vmatprep.subr.mxu0 0.0
    %1086 = vmatpush2.msra.mxu0 0.0
    %1087 = vmatprep.subr.mxu0 0.0
    %1088 = vmatpush2.msra.mxu0 0.0
    %1089 = vmatprep.subr.mxu0 0.0
    %1090 = vmatpush2.msra.mxu0 0.0
    %1091 = vmatprep.subr.mxu0 0.0
    %1092 = vmatpush2.msra.mxu0 0.0
    %1093 = vmatprep.subr.mxu0 0.0
    %1094 = vmatpush2.msra.mxu0 0.0
    %1095 = vmatprep.subr.mxu0 0.0
    %1096 = vmatpush2.msra.mxu0 0.0
    %1097 = vmatprep.subr.mxu0 0.0
    %1098 = vmatpush2.msra.mxu0 0.0
    %1099 = vmatprep.subr.mxu0 0.0
    %1100 = vmatpush2.msra.mxu0 0.0
    %1101 = vmatprep.subr.mxu0 0.0
    %1102 = vmatpush2.msra.mxu0 0.0
    %1103 = vmatprep.subr.mxu0 0.0
    %1104 = vmatpush2.msra.mxu0 0.0
    %1105 = vmatprep.subr.mxu0 0.0
    %1106 = vmatpush2.msra.mxu0 0.0
    %1107 = vmatprep.subr.mxu0 0.0
    %1108 = vmatpush2.msra.mxu0 0.0
    %1109 = vmatprep.subr.mxu0 0.0
    %1110 = vmatpush2.msra.mxu0 0.0
    %1111 = vmatprep.subr.mxu0 0.0
    %1112 = vmatpush2.msra.mxu0 0.0
    %1113 = vmatprep.mubr.f32.mxu0 0.0
    %1114 = vmatmul.mubr.f32.gmra.mxu0 %v1047
    %v1115 = vpop.f32.mrf.mxu0
    %v1116 = vadd.f32 %v1044, %v1115
    %v1117 = vpop.f32.mrf.mxu0
    %1118 = vdwg.mxu0
    %v1119 = vtanh.pop %v1116
    %v1120 = vxor.u32 %v1116, 2147483648
    %v1121 = vmul.f32 %v1120, 1.442695
    %v1122 = vpow.pop %v1121
    %v1123 = vadd.f32 %v1122, 1.0
    %v1124 = vrcp.pop %v1123
    %v1125 = vmul.f32 1.0, %v1124
    %v1126 = vmul.f32 %v1119, %v1125
    %s1127 = scalar_lea.vmem [#allocation5], 176
    %v1128 = vld [vmem:[%s1127] sm:$0xff]
    %v1129 = vld [vmem:[%s1127 + $0x8] sm:$0xff]
    %v1131 = vsel %vm169, %v1128, 0
    %v1134 = vsel %vm169, %v1129, 0
    %1136 = vmatprep.subr.mxu0 0.0
    %1137 = vmatpush1.msra.mxu0 0.0
    %1138 = vmatprep.subr.mxu0 0.0
    %1139 = vmatpush1.msra.mxu0 0.0
    %1140 = vmatprep.subr.mxu0 0.0
    %1141 = vmatpush1.msra.mxu0 0.0
    %1142 = vmatprep.subr.mxu0 0.0
    %1143 = vmatpush1.msra.mxu0 0.0
    %1144 = vmatprep.subr.mxu0 0.0
    %1145 = vmatpush1.msra.mxu0 0.0
    %1146 = vmatprep.subr.mxu0 0.0
    %1147 = vmatpush1.msra.mxu0 0.0
    %1148 = vmatprep.subr.mxu0 0.0
    %1149 = vmatpush1.msra.mxu0 0.0
    %1150 = vmatprep.subr.mxu0 0.0
    %1151 = vmatpush1.msra.mxu0 0.0
    %1152 = vmatprep.subr.mxu0 0.0
    %1153 = vmatpush1.msra.mxu0 0.0
    %1154 = vmatprep.subr.mxu0 0.0
    %1155 = vmatpush1.msra.mxu0 0.0
    %1156 = vmatprep.subr.mxu0 0.0
    %1157 = vmatpush1.msra.mxu0 0.0
    %1158 = vmatprep.subr.mxu0 0.0
    %1159 = vmatpush1.msra.mxu0 0.0
    %1160 = vmatprep.subr.mxu0 0.0
    %1161 = vmatpush1.msra.mxu0 0.0
    %1162 = vmatprep.subr.mxu0 0.0
    %1163 = vmatpush1.msra.mxu0 0.0
    %1164 = vmatprep.subr.mxu0 0.0
    %1165 = vmatpush1.msra.mxu0 0.0
    %1166 = vmatprep.subr.mxu0 0.0
    %1167 = vmatpush1.msra.mxu0 %v1126
    %1168 = vmatprep.subr.mxu0 0.0
    %1169 = vmatpush2.msra.mxu0 0.0
    %1170 = vmatprep.subr.mxu0 0.0
    %1171 = vmatpush2.msra.mxu0 0.0
    %1172 = vmatprep.subr.mxu0 0.0
    %1173 = vmatpush2.msra.mxu0 0.0
    %1174 = vmatprep.subr.mxu0 0.0
    %1175 = vmatpush2.msra.mxu0 0.0
    %1176 = vmatprep.subr.mxu0 0.0
    %1177 = vmatpush2.msra.mxu0 0.0
    %1178 = vmatprep.subr.mxu0 0.0
    %1179 = vmatpush2.msra.mxu0 0.0
    %1180 = vmatprep.subr.mxu0 0.0
    %1181 = vmatpush2.msra.mxu0 0.0
    %1182 = vmatprep.subr.mxu0 0.0
    %1183 = vmatpush2.msra.mxu0 0.0
    %1184 = vmatprep.subr.mxu0 0.0
    %1185 = vmatpush2.msra.mxu0 0.0
    %1186 = vmatprep.subr.mxu0 0.0
    %1187 = vmatpush2.msra.mxu0 0.0
    %1188 = vmatprep.subr.mxu0 0.0
    %1189 = vmatpush2.msra.mxu0 0.0
    %1190 = vmatprep.subr.mxu0 0.0
    %1191 = vmatpush2.msra.mxu0 0.0
    %1192 = vmatprep.subr.mxu0 0.0
    %1193 = vmatpush2.msra.mxu0 0.0
    %1194 = vmatprep.subr.mxu0 0.0
    %1195 = vmatpush2.msra.mxu0 0.0
    %1196 = vmatprep.subr.mxu0 0.0
    %1197 = vmatpush2.msra.mxu0 0.0
    %1198 = vmatprep.subr.mxu0 0.0
    %1199 = vmatpush2.msra.mxu0 0.0
    %1200 = vmatprep.mubr.f32.mxu0 0.0
    %1201 = vmatmul.mubr.f32.gmra.mxu0 %v1131
    %v1202 = vpop.f32.mrf.mxu0
    %v1203 = vpop.f32.mrf.mxu0
    %1204 = vmatprep.mubr.f32.mxu0 0.0
    %1205 = vmatmul.mubr.f32.gmra.mxu0 %v1134
    %v1206 = vpop.f32.mrf.mxu0
    %v1207 = vadd.f32 0.0, %v1206
    %v1208 = vpop.f32.mrf.mxu0
    %1209 = vdwg.mxu0
    %1210 = vset.pattern.permute.xlu0 17
    %1211 = vperm.xlu0 %1210, %v1040
    %v1212 = vpop.permute.xlu0 %1211
    %v1214 = vadd.f32 %v1207, %v1212
    %s1215 = scalar_lea.vmem [#allocation8], 40
    %1216 = vst [vmem:[%s1215] sm:$0xff] %v1214
    // Predicated region
    $region26: #{tpu_custom_call.1} parent=1 // pred_check
      _
    $region27: #{tpu_custom_call.1} parent=1 // pred_check_branch
      %1218 = sbr.rel (0) target = $region29
    $region28: #{tpu_custom_call.1} parent=1 // pred_region
      %s1220 = ssub.s32 768, 768
      %1221 = vsyncadd [#allocation4], %s1220
      %s1222 = sshll.u32 [#allocation8], 4
      %s1223 = int_to_ptr.vmem [resolvable:$true] %s1222
      %1228 = dma.vmem_to_hbm [thread:$0]  %s1223, 768, %s3, [#allocation4], 128, 128, 8
    $region29: #{tpu_custom_call.1} parent=1 // pred_fallthru
      _
    // Predicated region
    $region30: #{tpu_custom_call.1} parent=1 // pred_check
      _
    $region31: #{tpu_custom_call.1} parent=1 // pred_check_branch
      %1230 = sbr.rel (0) target = $region33
    $region32: #{tpu_custom_call.1} parent=1 // pred_region
      %1231 = dma.done [#allocation4], 768
    $region33: #{tpu_custom_call.1} parent=1 // pred_fallthru
      _
    %1232 = vsyncpa [#allocation3], 1
    %1233 = vsyncpa [#allocation6], 1
    %1234 = vsyncpa [#allocation4], 1

</llo_original>
